<compile_context>
chip_gen: v7x
topology: tpu7x:2x2x1
jax: 0.10.0
libtpu: 0.0.40
codegen_flags: <defaults>
</compile_context>

<pallas_src>
import jax
import jax.numpy as jnp
from jax.experimental import pallas as pl
from jax.experimental.pallas import tpu as pltpu

D_IN = 28 * 28
NUM_CLASSES = 10

# Original PyTorch layer widths and the lane-dense (128-padded) widths used in
# the kernel.
_DIMS = [D_IN, 128, 64, 32, 128, 64, NUM_CLASSES]
_PDIMS = [D_IN, 128, 128, 128, 128, 128, 128]

# Row offsets of each layer's weight block inside the packed (W_ROWS, 128)
# weight array. All offsets are multiples of 16 -> clean bf16 sublane tiles.
_W_ROW_OFFS = [0]
for _k in range(6):
    _W_ROW_OFFS.append(_W_ROW_OFFS[-1] + _PDIMS[_k])
W_ROWS = _W_ROW_OFFS[-1]  # 1424

# Activation per layer (None = final linear layer).
_ACTS = ("relu", "relu", "leaky", "relu", "relu", None)


def _leaky_relu(x, negative_slope=0.01):
    return jnp.where(x > 0, x, negative_slope * x)


def mlp_kernel(x_ref, w_ref, b_ref, out_ref):
    """Fused 6-layer MLP on one (tb, 784) batch tile.

    x_ref  : (tb, 784) f32 (cast to bf16 in-kernel)
    w_ref  : (1424, 128) bf16 packed weights (resident, constant index_map)
    b_ref  : (6, 128)   f32  packed biases
    out_ref: (tb, 128)  bf16 padded logits (cols 10..127 are zero)
    """
    h = x_ref[...].astype(jnp.bfloat16)                       # in-kernel cast
    for k in range(6):
        w = w_ref[_W_ROW_OFFS[k]:_W_ROW_OFFS[k + 1], :]       # (d_in_k, 128) bf16
        b = b_ref[k:k + 1, :]                                 # (1, 128) f32
        y = jnp.dot(h, w, preferred_element_type=jnp.float32) + b   # f32 acc + bias
        act = _ACTS[k]
        if act is None:
            out_ref[...] = y.astype(out_ref.dtype)            # fc6 logits, bf16 store
        else:
            hb = y.astype(jnp.bfloat16)                       # activations in bf16
            if act == "relu":
                h = jnp.maximum(hb, 0.0)
            else:                                             # leaky_relu (slope 0.01)
                h = jnp.where(hb > 0, hb, 0.01 * hb)
        # dropout layers (after fc1 and fc3) are eval-mode identity.


def prepare_params(params):
    """Zero-pad weights/biases to lane-dense 128 widths and pack them.

    Returns (w_packed: (1424,128) bf16, b_packed: (6,128) f32)."""
    w_blocks, b_blocks = [], []
    for k in range(6):
        w = params[f"W{k + 1}"]                               # (dims[k], dims[k+1]) f32
        b = params[f"b{k + 1}"]                               # (1, dims[k+1]) f32
        wp = jnp.pad(w, ((0, _PDIMS[k] - w.shape[0]),
                         (0, _PDIMS[k + 1] - w.shape[1])))
        bp = jnp.pad(b, ((0, 0), (0, _PDIMS[k + 1] - b.shape[1])))
        w_blocks.append(wp.astype(jnp.bfloat16))
        b_blocks.append(bp.astype(jnp.float32))
    return jnp.concatenate(w_blocks, axis=0), jnp.concatenate(b_blocks, axis=0)


def _pick_tb(n, desired=512):
    """Batch tile: multiple of 128, >= 2 grid steps when the batch allows it."""
    n128 = ((max(n, 1) + 127) // 128) * 128
    if n128 >= 2 * desired:
        return desired
    return max(128, ((n128 // 2) // 128) * 128)


def nnetwork_forward(x, params, *, tb=None):
    """x: (N, 1, 28, 28) or (N, 784) float. params: dict of W*/b* (unpadded, f32).

    tb (batch tile) defaults to an auto-picked multiple of 128 (512 for large
    batches, shrunk so small batches still give >= 2 grid steps). Returns
    float32 logits of shape (N, 10)."""
    x2d = x.reshape(-1, D_IN)                                 # no dtype cast here
    n = x2d.shape[0]
    if tb is None:
        tb = _pick_tb(n)
    tb = max(128, min(int(tb), 2048) // 128 * 128)

    n_pad = pl.cdiv(n, tb) * tb
    if n_pad != n:
        x2d = jnp.pad(x2d, ((0, n_pad - n), (0, 0)))

    w_packed, b_packed = prepare_params(params)
    out_width = _PDIMS[-1]                                    # 128 (lane-dense output)

    in_specs = [
        pl.BlockSpec((tb, D_IN), lambda i: (i, 0)),           # input batch tile
        pl.BlockSpec((W_ROWS, 128), lambda i: (0, 0)),        # packed weights, resident
        pl.BlockSpec((6, 128), lambda i: (0, 0)),             # packed biases, resident
    ]
    out_specs = pl.BlockSpec((tb, out_width), lambda i: (i, 0))

    # VMEM budget: double-buffered input/output tiles, resident packed weights,
    # in-kernel bf16 copy of x plus (tb, 128) intermediates, Mosaic slack.
    # Clamped to 40 MiB so it stays well inside v7x's 64 MiB physical VMEM.
    vmem_bytes = (2 * tb * D_IN * 4          # input tile f32, double-buffered
                  + 2 * tb * out_width * 2   # output tile bf16, double-buffered
                  + tb * D_IN * 2            # bf16 copy of the input tile
                  + 8 * tb * 128 * 4         # activation intermediates headroom
                  + 2 * W_ROWS * 128 * 2     # packed weights (double-buffered)
                  + (4 << 20))               # compiler scratch slack
    vmem_bytes = int(min(max(vmem_bytes, 16 << 20), 40 << 20))

    out = pl.pallas_call(
        mlp_kernel,
        out_shape=jax.ShapeDtypeStruct((n_pad, out_width), jnp.bfloat16),
        grid_spec=pltpu.PrefetchScalarGridSpec(
            num_scalar_prefetch=0,
            grid=(n_pad // tb,),
            in_specs=in_specs,
            out_specs=out_specs,
        ),
        compiler_params=pltpu.CompilerParams(
            dimension_semantics=("parallel",),
            vmem_limit_bytes=vmem_bytes),
    )(x2d, w_packed, b_packed)

    return out[:n, :NUM_CLASSES].astype(jnp.float32)


def init_params(key):
    """Deterministic init matching PyTorch Linear's U(-1/sqrt(fan_in), ...).
    Weights stored transposed to (in, out); biases as (1, out). All f32."""
    params = {}
    for idx in range(6):
        fan_in, fan_out = _DIMS[idx], _DIMS[idx + 1]
        key, kw, kb = jax.random.split(key, 3)
        bound = 1.0 / jnp.sqrt(fan_in)
        params[f"W{idx + 1}"] = jax.random.uniform(
            kw, (fan_in, fan_out), jnp.float32, minval=-bound, maxval=bound)
        params[f"b{idx + 1}"] = jax.random.uniform(
            kb, (1, fan_out), jnp.float32, minval=-bound, maxval=bound)
    return params


def reference_forward(x, params):
    """Plain-JAX f32 reference matching the PyTorch forward (eval mode)."""
    h = x.reshape(-1, D_IN).astype(jnp.float32)
    h = jnp.maximum(h @ params["W1"] + params["b1"], 0.0)
    h = jnp.maximum(h @ params["W2"] + params["b2"], 0.0)
    h = _leaky_relu(h @ params["W3"] + params["b3"])
    h = jnp.maximum(h @ params["W4"] + params["b4"], 0.0)
    h = jnp.maximum(h @ params["W5"] + params["b5"], 0.0)
    return h @ params["W6"] + params["b6"]


if __name__ == "__main__":
    key = jax.random.PRNGKey(0)
    key, kx = jax.random.split(key)
    # Small NCHW MNIST-style batch; 300 is deliberately not a multiple of 128
    # to exercise the batch-padding path (auto tb=128 -> 3 grid steps here;
    # real workloads with large batches get tb=512 automatically).
    x = jax.random.normal(kx, (300, 1, 28, 28), dtype=jnp.float32)
    params = init_params(key)

    out = jax.block_until_ready(nnetwork_forward(x, params))

    ref = reference_forward(x, params)
    assert out.shape == (300, NUM_CLASSES)
    max_err = float(jnp.max(jnp.abs(out - ref)))
    # bf16 weights/activations + bf16 logits store vs full-f32 reference
    # -> loose tolerance (inference-grade; argmax unaffected).
    assert jnp.allclose(out, ref, atol=7e-2, rtol=7e-2), (
        f"mismatch vs reference, max abs err {max_err}")
    print("KERNEL_OK")
</pallas_src>

<mosaic_0001>
module attributes {stable_mosaic.version = 11 : i64} {
  func.func @mlp_kernel(%arg0: i32, %arg1: memref<128x784xf32, #tpu.memory_space<vmem>>, %arg2: memref<1424x128xbf16, #tpu.memory_space<vmem>>, %arg3: memref<6x128xf32, #tpu.memory_space<vmem>>, %arg4: memref<128x128xbf16, #tpu.memory_space<vmem>>) attributes {dimension_semantics = [#tpu.dimension_semantics<parallel>], iteration_bounds = array<i64: 3>, scalar_prefetch = 0 : i64, scratch_operands = 0 : i64, tpu.core_type = #tpu.core_type<tc>, window_params = [{transform_indices = @transform_0, window_bounds = array<i64: 128, 784>}, {pipeline_mode = #tpu.pipeline_mode<synchronous>, transform_indices = @transform_1, window_bounds = array<i64: 1424, 128>}, {pipeline_mode = #tpu.pipeline_mode<synchronous>, transform_indices = @transform_2, window_bounds = array<i64: 6, 128>}, {transform_indices = @transform_3, window_bounds = array<i64: 128, 128>}]} {
    %c0 = arith.constant 0 : index
    %c0_0 = arith.constant 0 : index
    %0 = vector.load %arg1[%c0, %c0_0] : memref<128x784xf32, #tpu.memory_space<vmem>>, vector<128x784xf32>
    %1 = arith.truncf %0 : vector<128x784xf32> to vector<128x784xbf16>
    %c0_1 = arith.constant 0 : index
    %c0_2 = arith.constant 0 : index
    %2 = vector.load %arg2[%c0_1, %c0_2] : memref<1424x128xbf16, #tpu.memory_space<vmem>>, vector<784x128xbf16>
    %c0_3 = arith.constant 0 : index
    %c0_4 = arith.constant 0 : index
    %3 = vector.load %arg3[%c0_3, %c0_4] : memref<6x128xf32, #tpu.memory_space<vmem>>, vector<1x128xf32>
    %cst = arith.constant dense<0.000000e+00> : vector<128x128xf32>
    %4 = tpu.matmul %1, %2, %cst {dimension_numbers = #tpu.dot_dimension_numbers<[1], [0], [0], [1], [0, 0, 1, 1], [], []>} : vector<128x784xbf16>, vector<784x128xbf16>, vector<128x128xf32> -> vector<128x128xf32>
    %5 = vector.broadcast %3 : vector<1x128xf32> to vector<128x128xf32>
    %6 = arith.addf %4, %5 : vector<128x128xf32>
    %7 = arith.truncf %6 : vector<128x128xf32> to vector<128x128xbf16>
    %cst_5 = arith.constant 0.000000e+00 : bf16
    %8 = vector.broadcast %cst_5 : bf16 to vector<128x128xbf16>
    %9 = arith.maximumf %7, %8 : vector<128x128xbf16>
    %c784 = arith.constant 784 : index
    %c0_6 = arith.constant 0 : index
    %10 = vector.load %arg2[%c784, %c0_6] : memref<1424x128xbf16, #tpu.memory_space<vmem>>, vector<128x128xbf16>
    %c1 = arith.constant 1 : index
    %c0_7 = arith.constant 0 : index
    %11 = vector.load %arg3[%c1, %c0_7] : memref<6x128xf32, #tpu.memory_space<vmem>>, vector<1x128xf32>
    %cst_8 = arith.constant dense<0.000000e+00> : vector<128x128xf32>
    %12 = tpu.matmul %9, %10, %cst_8 {dimension_numbers = #tpu.dot_dimension_numbers<[1], [0], [0], [1], [0, 0, 1, 1], [], []>} : vector<128x128xbf16>, vector<128x128xbf16>, vector<128x128xf32> -> vector<128x128xf32>
    %13 = vector.broadcast %11 : vector<1x128xf32> to vector<128x128xf32>
    %14 = arith.addf %12, %13 : vector<128x128xf32>
    %15 = arith.truncf %14 : vector<128x128xf32> to vector<128x128xbf16>
    %cst_9 = arith.constant 0.000000e+00 : bf16
    %16 = vector.broadcast %cst_9 : bf16 to vector<128x128xbf16>
    %17 = arith.maximumf %15, %16 : vector<128x128xbf16>
    %c912 = arith.constant 912 : index
    %c0_10 = arith.constant 0 : index
    %18 = vector.load %arg2[%c912, %c0_10] : memref<1424x128xbf16, #tpu.memory_space<vmem>>, vector<128x128xbf16>
    %c2 = arith.constant 2 : index
    %c0_11 = arith.constant 0 : index
    %19 = vector.load %arg3[%c2, %c0_11] : memref<6x128xf32, #tpu.memory_space<vmem>>, vector<1x128xf32>
    %cst_12 = arith.constant dense<0.000000e+00> : vector<128x128xf32>
    %20 = tpu.matmul %17, %18, %cst_12 {dimension_numbers = #tpu.dot_dimension_numbers<[1], [0], [0], [1], [0, 0, 1, 1], [], []>} : vector<128x128xbf16>, vector<128x128xbf16>, vector<128x128xf32> -> vector<128x128xf32>
    %21 = vector.broadcast %19 : vector<1x128xf32> to vector<128x128xf32>
    %22 = arith.addf %20, %21 : vector<128x128xf32>
    %23 = arith.truncf %22 : vector<128x128xf32> to vector<128x128xbf16>
    %cst_13 = arith.constant 0.000000e+00 : bf16
    %24 = vector.broadcast %cst_13 : bf16 to vector<128x128xbf16>
    %25 = arith.cmpf ogt, %23, %24 : vector<128x128xbf16>
    %cst_14 = arith.constant 1.000980e-02 : bf16
    %26 = vector.broadcast %cst_14 : bf16 to vector<128x128xbf16>
    %27 = arith.mulf %26, %23 : vector<128x128xbf16>
    %28 = arith.select %25, %23, %27 : vector<128x128xi1>, vector<128x128xbf16>
    %c1040 = arith.constant 1040 : index
    %c0_15 = arith.constant 0 : index
    %29 = vector.load %arg2[%c1040, %c0_15] : memref<1424x128xbf16, #tpu.memory_space<vmem>>, vector<128x128xbf16>
    %c3 = arith.constant 3 : index
    %c0_16 = arith.constant 0 : index
    %30 = vector.load %arg3[%c3, %c0_16] : memref<6x128xf32, #tpu.memory_space<vmem>>, vector<1x128xf32>
    %cst_17 = arith.constant dense<0.000000e+00> : vector<128x128xf32>
    %31 = tpu.matmul %28, %29, %cst_17 {dimension_numbers = #tpu.dot_dimension_numbers<[1], [0], [0], [1], [0, 0, 1, 1], [], []>} : vector<128x128xbf16>, vector<128x128xbf16>, vector<128x128xf32> -> vector<128x128xf32>
    %32 = vector.broadcast %30 : vector<1x128xf32> to vector<128x128xf32>
    %33 = arith.addf %31, %32 : vector<128x128xf32>
    %34 = arith.truncf %33 : vector<128x128xf32> to vector<128x128xbf16>
    %cst_18 = arith.constant 0.000000e+00 : bf16
    %35 = vector.broadcast %cst_18 : bf16 to vector<128x128xbf16>
    %36 = arith.maximumf %34, %35 : vector<128x128xbf16>
    %c1168 = arith.constant 1168 : index
    %c0_19 = arith.constant 0 : index
    %37 = vector.load %arg2[%c1168, %c0_19] : memref<1424x128xbf16, #tpu.memory_space<vmem>>, vector<128x128xbf16>
    %c4 = arith.constant 4 : index
    %c0_20 = arith.constant 0 : index
    %38 = vector.load %arg3[%c4, %c0_20] : memref<6x128xf32, #tpu.memory_space<vmem>>, vector<1x128xf32>
    %cst_21 = arith.constant dense<0.000000e+00> : vector<128x128xf32>
    %39 = tpu.matmul %36, %37, %cst_21 {dimension_numbers = #tpu.dot_dimension_numbers<[1], [0], [0], [1], [0, 0, 1, 1], [], []>} : vector<128x128xbf16>, vector<128x128xbf16>, vector<128x128xf32> -> vector<128x128xf32>
    %40 = vector.broadcast %38 : vector<1x128xf32> to vector<128x128xf32>
    %41 = arith.addf %39, %40 : vector<128x128xf32>
    %42 = arith.truncf %41 : vector<128x128xf32> to vector<128x128xbf16>
    %cst_22 = arith.constant 0.000000e+00 : bf16
    %43 = vector.broadcast %cst_22 : bf16 to vector<128x128xbf16>
    %44 = arith.maximumf %42, %43 : vector<128x128xbf16>
    %c1296 = arith.constant 1296 : index
    %c0_23 = arith.constant 0 : index
    %45 = vector.load %arg2[%c1296, %c0_23] : memref<1424x128xbf16, #tpu.memory_space<vmem>>, vector<128x128xbf16>
    %c5 = arith.constant 5 : index
    %c0_24 = arith.constant 0 : index
    %46 = vector.load %arg3[%c5, %c0_24] : memref<6x128xf32, #tpu.memory_space<vmem>>, vector<1x128xf32>
    %cst_25 = arith.constant dense<0.000000e+00> : vector<128x128xf32>
    %47 = tpu.matmul %44, %45, %cst_25 {dimension_numbers = #tpu.dot_dimension_numbers<[1], [0], [0], [1], [0, 0, 1, 1], [], []>} : vector<128x128xbf16>, vector<128x128xbf16>, vector<128x128xf32> -> vector<128x128xf32>
    %48 = vector.broadcast %46 : vector<1x128xf32> to vector<128x128xf32>
    %49 = arith.addf %47, %48 : vector<128x128xf32>
    %50 = arith.truncf %49 : vector<128x128xf32> to vector<128x128xbf16>
    %c0_26 = arith.constant 0 : index
    %c0_27 = arith.constant 0 : index
    %51 = vector.load %arg4[%c0_26, %c0_27] : memref<128x128xbf16, #tpu.memory_space<vmem>>, vector<128x128xbf16>
    tpu.vector_store %arg4[%c0_26, %c0_27], %50 {strides = array<i32>} : memref<128x128xbf16, #tpu.memory_space<vmem>>, vector<128x128xbf16>,
    return
  }
  func.func @transform_0(%arg0: i32) -> (i32, i32) {
    %c0_i32 = arith.constant 0 : i32
    %c0_i32_0 = arith.constant 0 : i32
    return %arg0, %c0_i32 : i32, i32
  }
  func.func @transform_1(%arg0: i32) -> (i32, i32) {
    %c0_i32 = arith.constant 0 : i32
    %c0_i32_0 = arith.constant 0 : i32
    %c0_i32_1 = arith.constant 0 : i32
    return %c0_i32, %c0_i32_0 : i32, i32
  }
  func.func @transform_2(%arg0: i32) -> (i32, i32) {
    %c0_i32 = arith.constant 0 : i32
    %c0_i32_0 = arith.constant 0 : i32
    %c0_i32_1 = arith.constant 0 : i32
    return %c0_i32, %c0_i32_0 : i32, i32
  }
  func.func @transform_3(%arg0: i32) -> (i32, i32) {
    %c0_i32 = arith.constant 0 : i32
    %c0_i32_0 = arith.constant 0 : i32
    return %arg0, %c0_i32 : i32, i32
  }
}

</mosaic_0001>

<llo_original>
// kernel: tpu_custom_call.1
$region0: #{tpu_custom_call.1}
  #allocation0 [shape = 'u32[]', space=smem, size = 0x4, offset = 0x4, fixed_abs, tag = 'smem constant byte address 0x4 - core index']
  #allocation1 [shape = 'u32[144,128]{1,0:T(1,128)}', space=vmem, size = 0x12000, scoped, tag = 'internal scratch']
  %s0 = inlined_call_operand.vmem [shape: f32[384,784], index: 0, kind: input, shape index: {}]
  %s1 = inlined_call_operand.vmem [shape: bf16[1424,128], index: 1, kind: input, shape index: {}]
  %s2 = inlined_call_operand.vmem [shape: f32[6,128], index: 2, kind: input, shape index: {}]
  %s3 = inlined_call_operand.hbm [shape: bf16[384,128], index: 3, kind: output, shape index: {}]
  %s4 = sld [smem:[#allocation0]]
  $region45: #{tpu_custom_call.1} parent=0
    _
  %s6 = ssub.s32 1, %s4
  %s7 = scalar_select 0, %s6, %s4
  $region1: #{tpu_custom_call.1} parent=0
    #allocation2 [shape = 'u8[65536]{0}', space=vmem, size = 0x10000, scoped, tag = 'output window, operand 0']
    #allocation3 [shape = 's32[2]{0}', space=sflag, size = 0x8, scoped, tag = 'scoped memory for tpu_custom_call.1']
    %8 = vsyncpa [#allocation3], 0
    %s9 = scalar_lea.sflag [#allocation3], 1
    %10 = vsyncpa %s9, 0
    loop: start=0, step=1, limit=5
    $region2: #{tpu_custom_call.1} parent=1 // loop_pre_header
      _
    $region3: #{tpu_custom_call.1} parent=1 // loop_header
      %s12 = sphi 0, %s16
      %p13 = scmp.ge.s32.totalorder %s12, 5
      %s22 = sphi 0, %s24
      %s25 = sphi 0, %s22
      %s26 = sphi 0, %s25
      %s42 = sphi 0, %s26
      %s46 = sphi 0, %s46
      %s48 = sphi 0, %s46
      %s49 = sphi 0, %s48
      %s63 = sphi 0, %s49
      %s67 = sphi 0, %s67
      %s69 = sphi 0, %s67
      %s70 = sphi 0, %s69
      %s84 = sphi 0, %s70
      %s90 = sphi 0, %s92
      %s93 = sphi 0, %s90
      %s94 = sphi 0, %s93
      %s110 = sphi 0, %s94
    $region4: #{tpu_custom_call.1} parent=1 // loop_header_branch
      %15 = sbr.rel (%p13) target = $region8
    $region5: #{tpu_custom_call.1} parent=1 // loop_body
      %s17 = ssub.s32 %s12, 1
      %s18 = ssub.s32 %s12, 2
      %s19 = sadd.s32 %s12, 1
      %s20 = ssub.s32 %s12, %s19
      %p21 = scmp.eq.s32.totalorder %s20, 0
      %s23 = sadd.s32 %s22, 1
      %s24 = scalar_select %p21, %s22, %s23
      %p27 = pneg %p21
      %p28 = scmp.eq.s32.totalorder %s12, 2
      %p29 = por %p27, %p28
      %p30 = scmp.ne.s32.totalorder %s22, %s25
      %p31 = scmp.eq.s32.totalorder %s12, 0
      %p32 = por %p30, %p31
      %p33 = scmp.ne.s32.totalorder %s22, %s25
      %p34 = scmp.eq.s32.totalorder %s17, 2
      %p35 = por %p33, %p34
      %p36 = scmp.ne.s32.totalorder %s25, %s26
      %p37 = scmp.eq.s32.totalorder %s17, 0
      %p38 = por %p36, %p37
      %p39 = scmp.ne.s32.totalorder %s25, %s26
      %p40 = scmp.eq.s32.totalorder %s18, 2
      %p41 = por %p39, %p40
      %p43 = scmp.ne.s32.totalorder %s26, %s42
      %p44 = scmp.eq.s32.totalorder %s18, 0
      %p45 = por %p43, %p44
      %s47 = sadd.s32 %s46, 1
      %p50 = scmp.eq.s32.totalorder %s12, 2
      %p51 = scmp.ne.s32.totalorder %s46, %s48
      %p52 = scmp.eq.s32.totalorder %s12, 0
      %p53 = por %p51, %p52
      %p54 = scmp.ne.s32.totalorder %s46, %s48
      %p55 = scmp.eq.s32.totalorder %s17, 2
      %p56 = por %p54, %p55
      %p57 = scmp.ne.s32.totalorder %s48, %s49
      %p58 = scmp.eq.s32.totalorder %s17, 0
      %p59 = por %p57, %p58
      %p60 = scmp.ne.s32.totalorder %s48, %s49
      %p61 = scmp.eq.s32.totalorder %s18, 2
      %p62 = por %p60, %p61
      %p64 = scmp.ne.s32.totalorder %s49, %s63
      %p65 = scmp.eq.s32.totalorder %s18, 0
      %p66 = por %p64, %p65
      %s68 = sadd.s32 %s67, 1
      %p71 = scmp.eq.s32.totalorder %s12, 2
      %p72 = scmp.ne.s32.totalorder %s67, %s69
      %p73 = scmp.eq.s32.totalorder %s12, 0
      %p74 = por %p72, %p73
      %p75 = scmp.ne.s32.totalorder %s67, %s69
      %p76 = scmp.eq.s32.totalorder %s17, 2
      %p77 = por %p75, %p76
      %p78 = scmp.ne.s32.totalorder %s69, %s70
      %p79 = scmp.eq.s32.totalorder %s17, 0
      %p80 = por %p78, %p79
      %p81 = scmp.ne.s32.totalorder %s69, %s70
      %p82 = scmp.eq.s32.totalorder %s18, 2
      %p83 = por %p81, %p82
      %p85 = scmp.ne.s32.totalorder %s70, %s84
      %p86 = scmp.eq.s32.totalorder %s18, 0
      %p87 = por %p85, %p86
      %s88 = ssub.s32 %s12, %s19
      %p89 = scmp.eq.s32.totalorder %s88, 0
      %s91 = sadd.s32 %s90, 1
      %s92 = scalar_select %p89, %s90, %s91
      %p95 = pneg %p89
      %p96 = scmp.eq.s32.totalorder %s12, 2
      %p97 = por %p95, %p96
      %p98 = scmp.ne.s32.totalorder %s90, %s93
      %p99 = scmp.eq.s32.totalorder %s12, 0
      %p100 = por %p98, %p99
      %p101 = scmp.ne.s32.totalorder %s90, %s93
      %p102 = scmp.eq.s32.totalorder %s17, 2
      %p103 = por %p101, %p102
      %p104 = scmp.ne.s32.totalorder %s93, %s94
      %p105 = scmp.eq.s32.totalorder %s17, 0
      %p106 = por %p104, %p105
      %p107 = scmp.ne.s32.totalorder %s93, %s94
      %p108 = scmp.eq.s32.totalorder %s18, 2
      %p109 = por %p107, %p108
      %p111 = scmp.ne.s32.totalorder %s94, %s110
      %p112 = scmp.eq.s32.totalorder %s18, 0
      %p113 = por %p111, %p112
      %p114 = scmp.le.s32.totalorder 1, %s12
      %p115 = scmp.lt.s32.totalorder %s12, 4
      %p116 = pnand %p114, %p115
      %p117 = pneg %p116
      // Predicated region
      $region9: #{tpu_custom_call.1} parent=5 // pred_check
        _
      $region10: #{tpu_custom_call.1} parent=5 // pred_check_branch
        %119 = sbr.rel (%p116) target = $region12
      $region11: #{tpu_custom_call.1} parent=5 // pred_region
        %s120 = ssub.s32 %s12, 1
        // Predicated region
        $region13: #{tpu_custom_call.1} parent=11 // pred_check
          %p121 = pneg %p59
        $region14: #{tpu_custom_call.1} parent=11 // pred_check_branch
          %123 = sbr.rel (%p121) target = $region16
        $region15: #{tpu_custom_call.1} parent=11 // pred_region
          _
        $region16: #{tpu_custom_call.1} parent=11 // pred_fallthru
          _
        // Predicated region
        $region17: #{tpu_custom_call.1} parent=11 // pred_check
          %p124 = pneg %p80
        $region18: #{tpu_custom_call.1} parent=11 // pred_check_branch
          %126 = sbr.rel (%p124) target = $region20
        $region19: #{tpu_custom_call.1} parent=11 // pred_region
          _
        $region20: #{tpu_custom_call.1} parent=11 // pred_fallthru
          _
      $region12: #{tpu_custom_call.1} parent=5 // pred_fallthru
        _
      %p127 = scmp.lt.s32.totalorder %s12, 3
      // Predicated region
      $region21: #{tpu_custom_call.1} parent=5 // pred_check
        %p128 = pneg %p127
      $region22: #{tpu_custom_call.1} parent=5 // pred_check_branch
        %130 = sbr.rel (%p128) target = $region24
      $region23: #{tpu_custom_call.1} parent=5 // pred_region
        // Predicated region
        $region25: #{tpu_custom_call.1} parent=23 // pred_check
          %p131 = pneg %p32
        $region26: #{tpu_custom_call.1} parent=23 // pred_check_branch
          %133 = sbr.rel (%p131) target = $region28
        $region27: #{tpu_custom_call.1} parent=23 // pred_region
          %s134 = smul.u32 16, %s12
          %p135 = scmp.lt.s32.totalorder %s134, 47
          %s136 = scalar_select %p135, %s134, 47
          %s137 = smul.addr %s136, 7
          %s138 = smul.addr %s137, 8
          %s139 = scalar_lea.vmem %s0, %s138
          %s140 = smul.u32 16, %s12
        $region28: #{tpu_custom_call.1} parent=23 // pred_fallthru
          _
      $region24: #{tpu_custom_call.1} parent=5 // pred_fallthru
        _
      %p141 = scmp.le.s32.totalorder 1, %s12
      %p142 = scmp.lt.s32.totalorder %s12, 4
      %p143 = pnand %p141, %p142
      %p144 = pneg %p143
      // Predicated region
      $region29: #{tpu_custom_call.1} parent=5 // pred_check
        _
      $region30: #{tpu_custom_call.1} parent=5 // pred_check_branch
        %146 = sbr.rel (%p143) target = $region32
      $region31: #{tpu_custom_call.1} parent=5 // pred_region
        %s147 = ssub.s32 %s12, 1
        %s148 = smul.u32 16, %s17
        %p149 = scmp.lt.s32.totalorder %s148, 47
        %s150 = scalar_select %p149, %s148, 47
        %s151 = smul.addr %s150, 7
        %s152 = smul.addr %s151, 8
        %s153 = scalar_lea.vmem %s0, %s152
        %p154 = pneg %p38
        %p155 = pneg %p35
        %p156 = pneg %p59
        %p157 = pneg %p56
        %p158 = pneg %p80
        %p159 = pneg %p77
        %p160 = pneg %p106
        %p161 = pneg %p103
        %s162 = sand.u32 %s93, 1
        %s163 = scalar_lea.sflag [#allocation3], %s162
        %s164 = sand.u32 %s93, 1
        %s165 = smul.addr %s164, 64
        %s166 = scalar_lea.vmem [#allocation2], %s165
        %s167 = smul.u32 16, %s17
        %p168 = scmp.lt.s32.totalorder %s167, 47
        %s169 = scalar_select %p168, %s167, 47
        %s170 = smul.addr %s169, 7
        %s171 = smul.addr %s170, 8
        %s172 = scalar_lea.vmem %s0, %s171
        %s173 = smul.u32 16, %s17
        %s174 = smul.u32 16, %s17
        %v177 = vld [vmem:[%s172] sm:$0xff]
        %v178 = vld [vmem:[%s172 + $0x8] sm:$0xff]
        %v179 = vld [vmem:[%s172 + $0x10] sm:$0xff]
        %v180 = vld [vmem:[%s172 + $0x18] sm:$0xff]
        %v181 = vld [vmem:[%s172 + $0x20] sm:$0xff]
        %v182 = vld [vmem:[%s172 + $0x28] sm:$0xff]
        %v183 = vld [vmem:[%s172 + $0x30] sm:$0xff]
        %v184 = vld [vmem:[%s172 + $0x38] sm:$0xff]
        %v185 = vld [vmem:[%s172 + $0x40] sm:$0xff]
        %v186 = vld [vmem:[%s172 + $0x48] sm:$0xff]
        %v187 = vld [vmem:[%s172 + $0x50] sm:$0xff]
        %v188 = vld [vmem:[%s172 + $0x58] sm:$0xff]
        %v189 = vld [vmem:[%s172 + $0x60] sm:$0xff]
        %v190 = vld [vmem:[%s172 + $0x68] sm:$0xff]
        %v191 = vld [vmem:[%s172 + $0x70] sm:$0xff]
        %v192 = vld [vmem:[%s172 + $0x78] sm:$0xff]
        %v193 = vld [vmem:[%s172 + $0x80] sm:$0xff]
        %v194 = vld [vmem:[%s172 + $0x88] sm:$0xff]
        %v195 = vld [vmem:[%s172 + $0x90] sm:$0xff]
        %v196 = vld [vmem:[%s172 + $0x98] sm:$0xff]
        %v197 = vld [vmem:[%s172 + $0xa0] sm:$0xff]
        %v198 = vld [vmem:[%s172 + $0xa8] sm:$0xff]
        %v199 = vld [vmem:[%s172 + $0xb0] sm:$0xff]
        %v200 = vld [vmem:[%s172 + $0xb8] sm:$0xff]
        %v201 = vld [vmem:[%s172 + $0xc0] sm:$0xff]
        %v202 = vld [vmem:[%s172 + $0xc8] sm:$0xff]
        %v203 = vld [vmem:[%s172 + $0xd0] sm:$0xff]
        %v204 = vld [vmem:[%s172 + $0xd8] sm:$0xff]
        %v205 = vld [vmem:[%s172 + $0xe0] sm:$0xff]
        %v206 = vld [vmem:[%s172 + $0xe8] sm:$0xff]
        %v207 = vld [vmem:[%s172 + $0xf0] sm:$0xff]
        %v208 = vld [vmem:[%s172 + $0xf8] sm:$0xff]
        %v209 = vld [vmem:[%s172 + $0x100] sm:$0xff]
        %v210 = vld [vmem:[%s172 + $0x108] sm:$0xff]
        %v211 = vld [vmem:[%s172 + $0x110] sm:$0xff]
        %v212 = vld [vmem:[%s172 + $0x118] sm:$0xff]
        %v213 = vld [vmem:[%s172 + $0x120] sm:$0xff]
        %v214 = vld [vmem:[%s172 + $0x128] sm:$0xff]
        %v215 = vld [vmem:[%s172 + $0x130] sm:$0xff]
        %v216 = vld [vmem:[%s172 + $0x138] sm:$0xff]
        %v217 = vld [vmem:[%s172 + $0x140] sm:$0xff]
        %v218 = vld [vmem:[%s172 + $0x148] sm:$0xff]
        %v219 = vld [vmem:[%s172 + $0x150] sm:$0xff]
        %v220 = vld [vmem:[%s172 + $0x158] sm:$0xff]
        %v221 = vld [vmem:[%s172 + $0x160] sm:$0xff]
        %v222 = vld [vmem:[%s172 + $0x168] sm:$0xff]
        %v223 = vld [vmem:[%s172 + $0x170] sm:$0xff]
        %v224 = vld [vmem:[%s172 + $0x178] sm:$0xff]
        %v225 = vld [vmem:[%s172 + $0x180] sm:$0xff]
        %v226 = vld [vmem:[%s172 + $0x188] sm:$0xff]
        %v227 = vld [vmem:[%s172 + $0x190] sm:$0xff]
        %v228 = vld [vmem:[%s172 + $0x198] sm:$0xff]
        %v229 = vld [vmem:[%s172 + $0x1a0] sm:$0xff]
        %v230 = vld [vmem:[%s172 + $0x1a8] sm:$0xff]
        %v231 = vld [vmem:[%s172 + $0x1b0] sm:$0xff]
        %v232 = vld [vmem:[%s172 + $0x1b8] sm:$0xff]
        %v233 = vld [vmem:[%s172 + $0x1c0] sm:$0xff]
        %v234 = vld [vmem:[%s172 + $0x1c8] sm:$0xff]
        %v235 = vld [vmem:[%s172 + $0x1d0] sm:$0xff]
        %v236 = vld [vmem:[%s172 + $0x1d8] sm:$0xff]
        %v237 = vld [vmem:[%s172 + $0x1e0] sm:$0xff]
        %v238 = vld [vmem:[%s172 + $0x1e8] sm:$0xff]
        %v239 = vld [vmem:[%s172 + $0x1f0] sm:$0xff]
        %v240 = vld [vmem:[%s172 + $0x1f8] sm:$0xff]
        %v241 = vld [vmem:[%s172 + $0x200] sm:$0xff]
        %v242 = vld [vmem:[%s172 + $0x208] sm:$0xff]
        %v243 = vld [vmem:[%s172 + $0x210] sm:$0xff]
        %v244 = vld [vmem:[%s172 + $0x218] sm:$0xff]
        %v245 = vld [vmem:[%s172 + $0x220] sm:$0xff]
        %v246 = vld [vmem:[%s172 + $0x228] sm:$0xff]
        %v247 = vld [vmem:[%s172 + $0x230] sm:$0xff]
        %v248 = vld [vmem:[%s172 + $0x238] sm:$0xff]
        %v249 = vld [vmem:[%s172 + $0x240] sm:$0xff]
        %v250 = vld [vmem:[%s172 + $0x248] sm:$0xff]
        %v251 = vld [vmem:[%s172 + $0x250] sm:$0xff]
        %v252 = vld [vmem:[%s172 + $0x258] sm:$0xff]
        %v253 = vld [vmem:[%s172 + $0x260] sm:$0xff]
        %v254 = vld [vmem:[%s172 + $0x268] sm:$0xff]
        %v255 = vld [vmem:[%s172 + $0x270] sm:$0xff]
        %v256 = vld [vmem:[%s172 + $0x278] sm:$0xff]
        %v257 = vld [vmem:[%s172 + $0x280] sm:$0xff]
        %v258 = vld [vmem:[%s172 + $0x288] sm:$0xff]
        %v259 = vld [vmem:[%s172 + $0x290] sm:$0xff]
        %v260 = vld [vmem:[%s172 + $0x298] sm:$0xff]
        %v261 = vld [vmem:[%s172 + $0x2a0] sm:$0xff]
        %v262 = vld [vmem:[%s172 + $0x2a8] sm:$0xff]
        %v263 = vld [vmem:[%s172 + $0x2b0] sm:$0xff]
        %v264 = vld [vmem:[%s172 + $0x2b8] sm:$0xff]
        %v265 = vld [vmem:[%s172 + $0x2c0] sm:$0xff]
        %v266 = vld [vmem:[%s172 + $0x2c8] sm:$0xff]
        %v267 = vld [vmem:[%s172 + $0x2d0] sm:$0xff]
        %v268 = vld [vmem:[%s172 + $0x2d8] sm:$0xff]
        %v269 = vld [vmem:[%s172 + $0x2e0] sm:$0xff]
        %v270 = vld [vmem:[%s172 + $0x2e8] sm:$0xff]
        %v271 = vld [vmem:[%s172 + $0x2f0] sm:$0xff]
        %v272 = vld [vmem:[%s172 + $0x2f8] sm:$0xff]
        %v273 = vld [vmem:[%s172 + $0x300] sm:$0xff]
        %v274 = vld [vmem:[%s172 + $0x308] sm:$0xff]
        %v275 = vld [vmem:[%s172 + $0x310] sm:$0xff]
        %v276 = vld [vmem:[%s172 + $0x318] sm:$0xff]
        %v277 = vld [vmem:[%s172 + $0x320] sm:$0xff]
        %v278 = vld [vmem:[%s172 + $0x328] sm:$0xff]
        %v279 = vld [vmem:[%s172 + $0x330] sm:$0xff]
        %v280 = vld [vmem:[%s172 + $0x338] sm:$0xff]
        %v281 = vld [vmem:[%s172 + $0x340] sm:$0xff]
        %v282 = vld [vmem:[%s172 + $0x348] sm:$0xff]
        %v283 = vld [vmem:[%s172 + $0x350] sm:$0xff]
        %v284 = vld [vmem:[%s172 + $0x358] sm:$0xff]
        %v285 = vld [vmem:[%s172 + $0x360] sm:$0xff]
        %v286 = vld [vmem:[%s172 + $0x368] sm:$0xff]
        %v287 = vld [vmem:[%s172 + $0x370] sm:$0xff]
        %v288 = vld [vmem:[%s172 + $0x378] sm:$0xff]
        %v289 = vpack.c.bf16 %v184, %v177
        %v290 = vpack.c.bf16 %v185, %v178
        %v291 = vpack.c.bf16 %v186, %v179
        %v292 = vpack.c.bf16 %v187, %v180
        %v293 = vpack.c.bf16 %v188, %v181
        %v294 = vpack.c.bf16 %v189, %v182
        %v295 = vpack.c.bf16 %v190, %v183
        %v296 = vpack.c.bf16 %v198, %v191
        %v297 = vpack.c.bf16 %v199, %v192
        %v298 = vpack.c.bf16 %v200, %v193
        %v299 = vpack.c.bf16 %v201, %v194
        %v300 = vpack.c.bf16 %v202, %v195
        %v301 = vpack.c.bf16 %v203, %v196
        %v302 = vpack.c.bf16 %v204, %v197
        %v303 = vpack.c.bf16 %v212, %v205
        %v304 = vpack.c.bf16 %v213, %v206
        %v305 = vpack.c.bf16 %v214, %v207
        %v306 = vpack.c.bf16 %v215, %v208
        %v307 = vpack.c.bf16 %v216, %v209
        %v308 = vpack.c.bf16 %v217, %v210
        %v309 = vpack.c.bf16 %v218, %v211
        %v310 = vpack.c.bf16 %v226, %v219
        %v311 = vpack.c.bf16 %v227, %v220
        %v312 = vpack.c.bf16 %v228, %v221
        %v313 = vpack.c.bf16 %v229, %v222
        %v314 = vpack.c.bf16 %v230, %v223
        %v315 = vpack.c.bf16 %v231, %v224
        %v316 = vpack.c.bf16 %v232, %v225
        %v317 = vpack.c.bf16 %v240, %v233
        %v318 = vpack.c.bf16 %v241, %v234
        %v319 = vpack.c.bf16 %v242, %v235
        %v320 = vpack.c.bf16 %v243, %v236
        %v321 = vpack.c.bf16 %v244, %v237
        %v322 = vpack.c.bf16 %v245, %v238
        %v323 = vpack.c.bf16 %v246, %v239
        %v324 = vpack.c.bf16 %v254, %v247
        %v325 = vpack.c.bf16 %v255, %v248
        %v326 = vpack.c.bf16 %v256, %v249
        %v327 = vpack.c.bf16 %v257, %v250
        %v328 = vpack.c.bf16 %v258, %v251
        %v329 = vpack.c.bf16 %v259, %v252
        %v330 = vpack.c.bf16 %v260, %v253
        %v331 = vpack.c.bf16 %v268, %v261
        %v332 = vpack.c.bf16 %v269, %v262
        %v333 = vpack.c.bf16 %v270, %v263
        %v334 = vpack.c.bf16 %v271, %v264
        %v335 = vpack.c.bf16 %v272, %v265
        %v336 = vpack.c.bf16 %v273, %v266
        %v337 = vpack.c.bf16 %v274, %v267
        %v338 = vpack.c.bf16 %v282, %v275
        %v339 = vpack.c.bf16 %v283, %v276
        %v340 = vpack.c.bf16 %v284, %v277
        %v341 = vpack.c.bf16 %v285, %v278
        %v342 = vpack.c.bf16 %v286, %v279
        %v343 = vpack.c.bf16 %v287, %v280
        %v344 = vpack.c.bf16 %v288, %v281
        %v345 = vld [vmem:[%s1] sm:$0xf]
        %v346 = vld [vmem:[%s1 + $0x4] sm:$0xf]
        %v347 = vld [vmem:[%s1 + $0x8] sm:$0xf]
        %v348 = vld [vmem:[%s1 + $0xc] sm:$0xf]
        %v349 = vld [vmem:[%s1 + $0x10] sm:$0xf]
        %v350 = vld [vmem:[%s1 + $0x14] sm:$0xf]
        %v351 = vld [vmem:[%s1 + $0x18] sm:$0xf]
        %v352 = vld [vmem:[%s1 + $0x1c] sm:$0xf]
        %v353 = vld [vmem:[%s1 + $0x20] sm:$0xf]
        %v354 = vld [vmem:[%s1 + $0x24] sm:$0xf]
        %v355 = vld [vmem:[%s1 + $0x28] sm:$0xf]
        %v356 = vld [vmem:[%s1 + $0x2c] sm:$0xf]
        %v357 = vld [vmem:[%s1 + $0x30] sm:$0xf]
        %v358 = vld [vmem:[%s1 + $0x34] sm:$0xf]
        %v359 = vld [vmem:[%s1 + $0x38] sm:$0xf]
        %v360 = vld [vmem:[%s1 + $0x3c] sm:$0xf]
        %v361 = vld [vmem:[%s1 + $0x40] sm:$0xf]
        %v362 = vld [vmem:[%s1 + $0x44] sm:$0xf]
        %v363 = vld [vmem:[%s1 + $0x48] sm:$0xf]
        %v364 = vld [vmem:[%s1 + $0x4c] sm:$0xf]
        %v365 = vld [vmem:[%s1 + $0x50] sm:$0xf]
        %v366 = vld [vmem:[%s1 + $0x54] sm:$0xf]
        %v367 = vld [vmem:[%s1 + $0x58] sm:$0xf]
        %v368 = vld [vmem:[%s1 + $0x5c] sm:$0xf]
        %v369 = vld [vmem:[%s1 + $0x60] sm:$0xf]
        %v370 = vld [vmem:[%s1 + $0x64] sm:$0xf]
        %v371 = vld [vmem:[%s1 + $0x68] sm:$0xf]
        %v372 = vld [vmem:[%s1 + $0x6c] sm:$0xf]
        %v373 = vld [vmem:[%s1 + $0x70] sm:$0xf]
        %v374 = vld [vmem:[%s1 + $0x74] sm:$0xf]
        %v375 = vld [vmem:[%s1 + $0x78] sm:$0xf]
        %v376 = vld [vmem:[%s1 + $0x7c] sm:$0xf]
        %v377 = vld [vmem:[%s1 + $0x80] sm:$0xf]
        %v378 = vld [vmem:[%s1 + $0x84] sm:$0xf]
        %v379 = vld [vmem:[%s1 + $0x88] sm:$0xf]
        %v380 = vld [vmem:[%s1 + $0x8c] sm:$0xf]
        %v381 = vld [vmem:[%s1 + $0x90] sm:$0xf]
        %v382 = vld [vmem:[%s1 + $0x94] sm:$0xf]
        %v383 = vld [vmem:[%s1 + $0x98] sm:$0xf]
        %v384 = vld [vmem:[%s1 + $0x9c] sm:$0xf]
        %v385 = vld [vmem:[%s1 + $0xa0] sm:$0xf]
        %v386 = vld [vmem:[%s1 + $0xa4] sm:$0xf]
        %v387 = vld [vmem:[%s1 + $0xa8] sm:$0xf]
        %v388 = vld [vmem:[%s1 + $0xac] sm:$0xf]
        %v389 = vld [vmem:[%s1 + $0xb0] sm:$0xf]
        %v390 = vld [vmem:[%s1 + $0xb4] sm:$0xf]
        %v391 = vld [vmem:[%s1 + $0xb8] sm:$0xf]
        %v392 = vld [vmem:[%s1 + $0xbc] sm:$0xf]
        %v393 = vld [vmem:[%s1 + $0xc0] sm:$0xf]
        %v394 = vld [vmem:[%s1 + $0xc4] sm:$0xf]
        %v395 = vld [vmem:[%s1 + $0xc8] sm:$0xf]
        %v396 = vld [vmem:[%s1 + $0xcc] sm:$0xf]
        %v397 = vld [vmem:[%s1 + $0xd0] sm:$0xf]
        %v398 = vld [vmem:[%s1 + $0xd4] sm:$0xf]
        %v399 = vld [vmem:[%s1 + $0xd8] sm:$0xf]
        %v400 = vld [vmem:[%s1 + $0xdc] sm:$0xf]
        %v401 = vld [vmem:[%s1 + $0xe0] sm:$0xf]
        %v402 = vld [vmem:[%s1 + $0xe4] sm:$0xf]
        %v403 = vld [vmem:[%s1 + $0xe8] sm:$0xf]
        %v404 = vld [vmem:[%s1 + $0xec] sm:$0xf]
        %v405 = vld [vmem:[%s1 + $0xf0] sm:$0xf]
        %v406 = vld [vmem:[%s1 + $0xf4] sm:$0xf]
        %v407 = vld [vmem:[%s1 + $0xf8] sm:$0xf]
        %v408 = vld [vmem:[%s1 + $0xfc] sm:$0xf]
        %v409 = vld [vmem:[%s1 + $0x100] sm:$0xf]
        %v410 = vld [vmem:[%s1 + $0x104] sm:$0xf]
        %v411 = vld [vmem:[%s1 + $0x108] sm:$0xf]
        %v412 = vld [vmem:[%s1 + $0x10c] sm:$0xf]
        %v413 = vld [vmem:[%s1 + $0x110] sm:$0xf]
        %v414 = vld [vmem:[%s1 + $0x114] sm:$0xf]
        %v415 = vld [vmem:[%s1 + $0x118] sm:$0xf]
        %v416 = vld [vmem:[%s1 + $0x11c] sm:$0xf]
        %v417 = vld [vmem:[%s1 + $0x120] sm:$0xf]
        %v418 = vld [vmem:[%s1 + $0x124] sm:$0xf]
        %v419 = vld [vmem:[%s1 + $0x128] sm:$0xf]
        %v420 = vld [vmem:[%s1 + $0x12c] sm:$0xf]
        %v421 = vld [vmem:[%s1 + $0x130] sm:$0xf]
        %v422 = vld [vmem:[%s1 + $0x134] sm:$0xf]
        %v423 = vld [vmem:[%s1 + $0x138] sm:$0xf]
        %v424 = vld [vmem:[%s1 + $0x13c] sm:$0xf]
        %v425 = vld [vmem:[%s1 + $0x140] sm:$0xf]
        %v426 = vld [vmem:[%s1 + $0x144] sm:$0xf]
        %v427 = vld [vmem:[%s1 + $0x148] sm:$0xf]
        %v428 = vld [vmem:[%s1 + $0x14c] sm:$0xf]
        %v429 = vld [vmem:[%s1 + $0x150] sm:$0xf]
        %v430 = vld [vmem:[%s1 + $0x154] sm:$0xf]
        %v431 = vld [vmem:[%s1 + $0x158] sm:$0xf]
        %v432 = vld [vmem:[%s1 + $0x15c] sm:$0xf]
        %v433 = vld [vmem:[%s1 + $0x160] sm:$0xf]
        %v434 = vld [vmem:[%s1 + $0x164] sm:$0xf]
        %v435 = vld [vmem:[%s1 + $0x168] sm:$0xf]
        %v436 = vld [vmem:[%s1 + $0x16c] sm:$0xf]
        %v437 = vld [vmem:[%s1 + $0x170] sm:$0xf]
        %v438 = vld [vmem:[%s1 + $0x174] sm:$0xf]
        %v439 = vld [vmem:[%s1 + $0x178] sm:$0xf]
        %v440 = vld [vmem:[%s1 + $0x17c] sm:$0xf]
        %v441 = vld [vmem:[%s1 + $0x180] sm:$0xf]
        %v442 = vld [vmem:[%s1 + $0x184] sm:$0xf]
        %v443 = vld [vmem:[%s2] sm:$0x1]
        %v444 = vlaneseq
        %v445 = vshrl.u32 %v444, 7
        %v446 = vsub.s32 0, %v445
        %v447 = vrot.slane %v443, %v446
        %v546 = vunpack.c.l.b16 %v345
        %v547 = vunpack.c.l.b16 %v346
        %v548 = vunpack.c.l.b16 %v347
        %v549 = vunpack.c.l.b16 %v348
        %v550 = vunpack.c.l.b16 %v349
        %v551 = vunpack.c.l.b16 %v350
        %v552 = vunpack.c.l.b16 %v351
        %v553 = vunpack.c.l.b16 %v352
        %v554 = vunpack.c.l.b16 %v353
        %v555 = vunpack.c.l.b16 %v354
        %v556 = vunpack.c.l.b16 %v355
        %v557 = vunpack.c.l.b16 %v356
        %v558 = vunpack.c.l.b16 %v357
        %v559 = vunpack.c.l.b16 %v358
        %v560 = vunpack.c.l.b16 %v359
        %v561 = vunpack.c.l.b16 %v360
        %v562 = vunpack.c.l.b16 %v361
        %v563 = vunpack.c.l.b16 %v362
        %v564 = vunpack.c.l.b16 %v363
        %v565 = vunpack.c.l.b16 %v364
        %v566 = vunpack.c.l.b16 %v365
        %v567 = vunpack.c.l.b16 %v366
        %v568 = vunpack.c.l.b16 %v367
        %v569 = vunpack.c.l.b16 %v368
        %v570 = vunpack.c.l.b16 %v369
        %v571 = vunpack.c.l.b16 %v370
        %v572 = vunpack.c.l.b16 %v371
        %v573 = vunpack.c.l.b16 %v372
        %v574 = vunpack.c.l.b16 %v373
        %v575 = vunpack.c.l.b16 %v374
        %v576 = vunpack.c.l.b16 %v375
        %v577 = vunpack.c.l.b16 %v376
        %v578 = vunpack.c.l.b16 %v377
        %v579 = vunpack.c.l.b16 %v378
        %v580 = vunpack.c.l.b16 %v379
        %v581 = vunpack.c.l.b16 %v380
        %v582 = vunpack.c.l.b16 %v381
        %v583 = vunpack.c.l.b16 %v382
        %v584 = vunpack.c.l.b16 %v383
        %v585 = vunpack.c.l.b16 %v384
        %v586 = vunpack.c.l.b16 %v385
        %v587 = vunpack.c.l.b16 %v386
        %v588 = vunpack.c.l.b16 %v387
        %v589 = vunpack.c.l.b16 %v388
        %v590 = vunpack.c.l.b16 %v389
        %v591 = vunpack.c.l.b16 %v390
        %v592 = vunpack.c.l.b16 %v391
        %v593 = vunpack.c.l.b16 %v392
        %v594 = vunpack.c.l.b16 %v393
        %v595 = vunpack.c.l.b16 %v394
        %v596 = vunpack.c.l.b16 %v395
        %v597 = vunpack.c.l.b16 %v396
        %v598 = vunpack.c.l.b16 %v397
        %v599 = vunpack.c.l.b16 %v398
        %v600 = vunpack.c.l.b16 %v399
        %v601 = vunpack.c.l.b16 %v400
        %v602 = vunpack.c.l.b16 %v401
        %v603 = vunpack.c.l.b16 %v402
        %v604 = vunpack.c.l.b16 %v403
        %v605 = vunpack.c.l.b16 %v404
        %v606 = vunpack.c.l.b16 %v405
        %v607 = vunpack.c.l.b16 %v406
        %v608 = vunpack.c.l.b16 %v407
        %v609 = vunpack.c.l.b16 %v408
        %v610 = vunpack.c.l.b16 %v409
        %v611 = vunpack.c.l.b16 %v410
        %v612 = vunpack.c.l.b16 %v411
        %v613 = vunpack.c.l.b16 %v412
        %v614 = vunpack.c.l.b16 %v413
        %v615 = vunpack.c.l.b16 %v414
        %v616 = vunpack.c.l.b16 %v415
        %v617 = vunpack.c.l.b16 %v416
        %v618 = vunpack.c.l.b16 %v417
        %v619 = vunpack.c.l.b16 %v418
        %v620 = vunpack.c.l.b16 %v419
        %v621 = vunpack.c.l.b16 %v420
        %v622 = vunpack.c.l.b16 %v421
        %v623 = vunpack.c.l.b16 %v422
        %v624 = vunpack.c.l.b16 %v423
        %v625 = vunpack.c.l.b16 %v424
        %v626 = vunpack.c.l.b16 %v425
        %v627 = vunpack.c.l.b16 %v426
        %v628 = vunpack.c.l.b16 %v427
        %v629 = vunpack.c.l.b16 %v428
        %v630 = vunpack.c.l.b16 %v429
        %v631 = vunpack.c.l.b16 %v430
        %v632 = vunpack.c.l.b16 %v431
        %v633 = vunpack.c.l.b16 %v432
        %v634 = vunpack.c.l.b16 %v433
        %v635 = vunpack.c.l.b16 %v434
        %v636 = vunpack.c.l.b16 %v435
        %v637 = vunpack.c.l.b16 %v436
        %v638 = vunpack.c.l.b16 %v437
        %v639 = vunpack.c.l.b16 %v438
        %v640 = vunpack.c.l.b16 %v439
        %v641 = vunpack.c.l.b16 %v440
        %v642 = vunpack.c.l.b16 %v441
        %v643 = vunpack.c.l.b16 %v442
        %v644 = vpack.c.b16 %v547, %v546
        %v645 = vpack.c.b16 %v549, %v548
        %v646 = vpack.c.b16 %v551, %v550
        %v647 = vpack.c.b16 %v553, %v552
        %v648 = vpack.c.b16 %v555, %v554
        %v649 = vpack.c.b16 %v557, %v556
        %v650 = vpack.c.b16 %v559, %v558
        %v651 = vpack.c.b16 %v561, %v560
        %v652 = vpack.c.b16 %v563, %v562
        %v653 = vpack.c.b16 %v565, %v564
        %v654 = vpack.c.b16 %v567, %v566
        %v655 = vpack.c.b16 %v569, %v568
        %v656 = vpack.c.b16 %v571, %v570
        %v657 = vpack.c.b16 %v573, %v572
        %v658 = vpack.c.b16 %v575, %v574
        %v659 = vpack.c.b16 %v577, %v576
        %v660 = vpack.c.b16 %v579, %v578
        %v661 = vpack.c.b16 %v581, %v580
        %v662 = vpack.c.b16 %v583, %v582
        %v663 = vpack.c.b16 %v585, %v584
        %v664 = vpack.c.b16 %v587, %v586
        %v665 = vpack.c.b16 %v589, %v588
        %v666 = vpack.c.b16 %v591, %v590
        %v667 = vpack.c.b16 %v593, %v592
        %v668 = vpack.c.b16 %v595, %v594
        %v669 = vpack.c.b16 %v597, %v596
        %v670 = vpack.c.b16 %v599, %v598
        %v671 = vpack.c.b16 %v601, %v600
        %v672 = vpack.c.b16 %v603, %v602
        %v673 = vpack.c.b16 %v605, %v604
        %v674 = vpack.c.b16 %v607, %v606
        %v675 = vpack.c.b16 %v609, %v608
        %v676 = vpack.c.b16 %v611, %v610
        %v677 = vpack.c.b16 %v613, %v612
        %v678 = vpack.c.b16 %v615, %v614
        %v679 = vpack.c.b16 %v617, %v616
        %v680 = vpack.c.b16 %v619, %v618
        %v681 = vpack.c.b16 %v621, %v620
        %v682 = vpack.c.b16 %v623, %v622
        %v683 = vpack.c.b16 %v625, %v624
        %v684 = vpack.c.b16 %v627, %v626
        %v685 = vpack.c.b16 %v629, %v628
        %v686 = vpack.c.b16 %v631, %v630
        %v687 = vpack.c.b16 %v633, %v632
        %v688 = vpack.c.b16 %v635, %v634
        %v689 = vpack.c.b16 %v637, %v636
        %v690 = vpack.c.b16 %v639, %v638
        %v691 = vpack.c.b16 %v641, %v640
        %v692 = vpack.c.b16 %v643, %v642
        %vm742 = vcmask 130048
        %v744 = vsel %vm742, %v295, 0
        %v747 = vsel %vm742, %v302, 0
        %v750 = vsel %vm742, %v309, 0
        %v753 = vsel %vm742, %v316, 0
        %v756 = vsel %vm742, %v323, 0
        %v759 = vsel %vm742, %v330, 0
        %v762 = vsel %vm742, %v337, 0
        %v765 = vsel %vm742, %v344, 0
        %767 = vmatprep.subr.bf16.mxu0 0
        %768 = vmatpush1.bf16.msra.mxu0 %v644
        %769 = vmatprep.subr.bf16.mxu0 0
        %770 = vmatpush1.bf16.msra.mxu0 %v645
        %771 = vmatprep.subr.bf16.mxu0 0
        %772 = vmatpush1.bf16.msra.mxu0 %v646
        %773 = vmatprep.subr.bf16.mxu0 0
        %774 = vmatpush1.bf16.msra.mxu0 %v647
        %775 = vmatprep.subr.bf16.mxu0 0
        %776 = vmatpush1.bf16.msra.mxu0 %v648
        %777 = vmatprep.subr.bf16.mxu0 0
        %778 = vmatpush1.bf16.msra.mxu0 %v649
        %779 = vmatprep.subr.bf16.mxu0 0
        %780 = vmatpush1.bf16.msra.mxu0 %v650
        %781 = vmatprep.subr.bf16.mxu0 0
        %782 = vmatpush1.bf16.msra.mxu0 %v651
        %783 = vmatprep.subr.bf16.mxu0 0
        %784 = vmatpush1.bf16.msra.mxu0 %v652
        %785 = vmatprep.subr.bf16.mxu0 0
        %786 = vmatpush1.bf16.msra.mxu0 %v653
        %787 = vmatprep.subr.bf16.mxu0 0
        %788 = vmatpush1.bf16.msra.mxu0 %v654
        %789 = vmatprep.subr.bf16.mxu0 0
        %790 = vmatpush1.bf16.msra.mxu0 %v655
        %791 = vmatprep.subr.bf16.mxu0 0
        %792 = vmatpush1.bf16.msra.mxu0 %v656
        %793 = vmatprep.subr.bf16.mxu0 0
        %794 = vmatpush1.bf16.msra.mxu0 %v657
        %795 = vmatprep.subr.bf16.mxu0 0
        %796 = vmatpush1.bf16.msra.mxu0 %v658
        %797 = vmatprep.subr.bf16.mxu0 0
        %798 = vmatpush1.bf16.msra.mxu0 %v659
        %799 = vmatprep.mubr.bf16.mxu0 %v290
        %800 = vmatmul.mubr.bf16.gmra.mrb[0].mxu0 %v289
        %v801 = vpop.f32.mrb[0].mxu0
        %v802 = vadd.f32 %v447, %v801
        %v803 = vpop.f32.mrb[0].mxu0
        %v804 = vpop.f32.mrb[0].mxu0
        %v805 = vadd.f32 %v447, %v804
        %v806 = vpop.f32.mrb[0].mxu0
        %807 = vmatprep.mubr.bf16.mxu0 %v297
        %808 = vmatmul.mubr.bf16.gmra.mrb[0].mxu0 %v296
        %v809 = vpop.f32.mrb[0].mxu0
        %v810 = vadd.f32 %v447, %v809
        %v811 = vpop.f32.mrb[0].mxu0
        %v812 = vpop.f32.mrb[0].mxu0
        %v813 = vadd.f32 %v447, %v812
        %v814 = vpop.f32.mrb[0].mxu0
        %815 = vmatprep.mubr.bf16.mxu0 %v304
        %816 = vmatmul.mubr.bf16.gmra.mrb[0].mxu0 %v303
        %v817 = vpop.f32.mrb[0].mxu0
        %v818 = vadd.f32 %v447, %v817
        %v819 = vpop.f32.mrb[0].mxu0
        %v820 = vpop.f32.mrb[0].mxu0
        %v821 = vadd.f32 %v447, %v820
        %v822 = vpop.f32.mrb[0].mxu0
        %823 = vmatprep.mubr.bf16.mxu0 %v311
        %824 = vmatmul.mubr.bf16.gmra.mrb[0].mxu0 %v310
        %v825 = vpop.f32.mrb[0].mxu0
        %v826 = vadd.f32 %v447, %v825
        %v827 = vpop.f32.mrb[0].mxu0
        %v828 = vpop.f32.mrb[0].mxu0
        %v829 = vadd.f32 %v447, %v828
        %v830 = vpop.f32.mrb[0].mxu0
        %831 = vmatprep.mubr.bf16.mxu0 %v318
        %832 = vmatmul.mubr.bf16.gmra.mrb[0].mxu0 %v317
        %v833 = vpop.f32.mrb[0].mxu0
        %v834 = vadd.f32 %v447, %v833
        %v835 = vpop.f32.mrb[0].mxu0
        %v836 = vpop.f32.mrb[0].mxu0
        %v837 = vadd.f32 %v447, %v836
        %v838 = vpop.f32.mrb[0].mxu0
        %839 = vmatprep.mubr.bf16.mxu0 %v325
        %840 = vmatmul.mubr.bf16.gmra.mrb[0].mxu0 %v324
        %v841 = vpop.f32.mrb[0].mxu0
        %v842 = vadd.f32 %v447, %v841
        %v843 = vpop.f32.mrb[0].mxu0
        %v844 = vpop.f32.mrb[0].mxu0
        %v845 = vadd.f32 %v447, %v844
        %v846 = vpop.f32.mrb[0].mxu0
        %847 = vmatprep.mubr.bf16.mxu0 %v332
        %848 = vmatmul.mubr.bf16.gmra.mrb[0].mxu0 %v331
        %v849 = vpop.f32.mrb[0].mxu0
        %v850 = vadd.f32 %v447, %v849
        %v851 = vpop.f32.mrb[0].mxu0
        %v852 = vpop.f32.mrb[0].mxu0
        %v853 = vadd.f32 %v447, %v852
        %v854 = vpop.f32.mrb[0].mxu0
        %855 = vmatprep.mubr.bf16.mxu0 %v339
        %856 = vmatmul.mubr.bf16.gmra.mrb[0].mxu0 %v338
        %v857 = vpop.f32.mrb[0].mxu0
        %v858 = vadd.f32 %v447, %v857
        %v859 = vpop.f32.mrb[0].mxu0
        %v860 = vpop.f32.mrb[0].mxu0
        %v861 = vadd.f32 %v447, %v860
        %v862 = vpop.f32.mrb[0].mxu0
        %863 = vdwg.mxu0
        %864 = vmatprep.subr.bf16.mxu0 0
        %865 = vmatpush1.bf16.msra.mxu0 %v660
        %866 = vmatprep.subr.bf16.mxu0 0
        %867 = vmatpush1.bf16.msra.mxu0 %v661
        %868 = vmatprep.subr.bf16.mxu0 0
        %869 = vmatpush1.bf16.msra.mxu0 %v662
        %870 = vmatprep.subr.bf16.mxu0 0
        %871 = vmatpush1.bf16.msra.mxu0 %v663
        %872 = vmatprep.subr.bf16.mxu0 0
        %873 = vmatpush1.bf16.msra.mxu0 %v664
        %874 = vmatprep.subr.bf16.mxu0 0
        %875 = vmatpush1.bf16.msra.mxu0 %v665
        %876 = vmatprep.subr.bf16.mxu0 0
        %877 = vmatpush1.bf16.msra.mxu0 %v666
        %878 = vmatprep.subr.bf16.mxu0 0
        %879 = vmatpush1.bf16.msra.mxu0 %v667
        %880 = vmatprep.subr.bf16.mxu0 0
        %881 = vmatpush1.bf16.msra.mxu0 %v668
        %882 = vmatprep.subr.bf16.mxu0 0
        %883 = vmatpush1.bf16.msra.mxu0 %v669
        %884 = vmatprep.subr.bf16.mxu0 0
        %885 = vmatpush1.bf16.msra.mxu0 %v670
        %886 = vmatprep.subr.bf16.mxu0 0
        %887 = vmatpush1.bf16.msra.mxu0 %v671
        %888 = vmatprep.subr.bf16.mxu0 0
        %889 = vmatpush1.bf16.msra.mxu0 %v672
        %890 = vmatprep.subr.bf16.mxu0 0
        %891 = vmatpush1.bf16.msra.mxu0 %v673
        %892 = vmatprep.subr.bf16.mxu0 0
        %893 = vmatpush1.bf16.msra.mxu0 %v674
        %894 = vmatprep.subr.bf16.mxu0 0
        %895 = vmatpush1.bf16.msra.mxu0 %v675
        %896 = vmatprep.mubr.bf16.mxu0 %v292
        %897 = vmatmul.mubr.bf16.gmra.mrb[0].mxu0 %v291
        %v898 = vpop.f32.mrb[0].mxu0
        %v899 = vadd.f32 %v802, %v898
        %v900 = vpop.f32.mrb[0].mxu0
        %v901 = vpop.f32.mrb[0].mxu0
        %v902 = vadd.f32 %v805, %v901
        %v903 = vpop.f32.mrb[0].mxu0
        %904 = vmatprep.mubr.bf16.mxu0 %v299
        %905 = vmatmul.mubr.bf16.gmra.mrb[0].mxu0 %v298
        %v906 = vpop.f32.mrb[0].mxu0
        %v907 = vadd.f32 %v810, %v906
        %v908 = vpop.f32.mrb[0].mxu0
        %v909 = vpop.f32.mrb[0].mxu0
        %v910 = vadd.f32 %v813, %v909
        %v911 = vpop.f32.mrb[0].mxu0
        %912 = vmatprep.mubr.bf16.mxu0 %v306
        %913 = vmatmul.mubr.bf16.gmra.mrb[0].mxu0 %v305
        %v914 = vpop.f32.mrb[0].mxu0
        %v915 = vadd.f32 %v818, %v914
        %v916 = vpop.f32.mrb[0].mxu0
        %v917 = vpop.f32.mrb[0].mxu0
        %v918 = vadd.f32 %v821, %v917
        %v919 = vpop.f32.mrb[0].mxu0
        %920 = vmatprep.mubr.bf16.mxu0 %v313
        %921 = vmatmul.mubr.bf16.gmra.mrb[0].mxu0 %v312
        %v922 = vpop.f32.mrb[0].mxu0
        %v923 = vadd.f32 %v826, %v922
        %v924 = vpop.f32.mrb[0].mxu0
        %v925 = vpop.f32.mrb[0].mxu0
        %v926 = vadd.f32 %v829, %v925
        %v927 = vpop.f32.mrb[0].mxu0
        %928 = vmatprep.mubr.bf16.mxu0 %v320
        %929 = vmatmul.mubr.bf16.gmra.mrb[0].mxu0 %v319
        %v930 = vpop.f32.mrb[0].mxu0
        %v931 = vadd.f32 %v834, %v930
        %v932 = vpop.f32.mrb[0].mxu0
        %v933 = vpop.f32.mrb[0].mxu0
        %v934 = vadd.f32 %v837, %v933
        %v935 = vpop.f32.mrb[0].mxu0
        %936 = vmatprep.mubr.bf16.mxu0 %v327
        %937 = vmatmul.mubr.bf16.gmra.mrb[0].mxu0 %v326
        %v938 = vpop.f32.mrb[0].mxu0
        %v939 = vadd.f32 %v842, %v938
        %v940 = vpop.f32.mrb[0].mxu0
        %v941 = vpop.f32.mrb[0].mxu0
        %v942 = vadd.f32 %v845, %v941
        %v943 = vpop.f32.mrb[0].mxu0
        %944 = vmatprep.mubr.bf16.mxu0 %v334
        %945 = vmatmul.mubr.bf16.gmra.mrb[0].mxu0 %v333
        %v946 = vpop.f32.mrb[0].mxu0
        %v947 = vadd.f32 %v850, %v946
        %v948 = vpop.f32.mrb[0].mxu0
        %v949 = vpop.f32.mrb[0].mxu0
        %v950 = vadd.f32 %v853, %v949
        %v951 = vpop.f32.mrb[0].mxu0
        %952 = vmatprep.mubr.bf16.mxu0 %v341
        %953 = vmatmul.mubr.bf16.gmra.mrb[0].mxu0 %v340
        %v954 = vpop.f32.mrb[0].mxu0
        %v955 = vadd.f32 %v858, %v954
        %v956 = vpop.f32.mrb[0].mxu0
        %v957 = vpop.f32.mrb[0].mxu0
        %v958 = vadd.f32 %v861, %v957
        %v959 = vpop.f32.mrb[0].mxu0
        %960 = vdwg.mxu0
        %961 = vmatprep.subr.bf16.mxu0 0
        %962 = vmatpush1.bf16.msra.mxu0 %v676
        %963 = vmatprep.subr.bf16.mxu0 0
        %964 = vmatpush1.bf16.msra.mxu0 %v677
        %965 = vmatprep.subr.bf16.mxu0 0
        %966 = vmatpush1.bf16.msra.mxu0 %v678
        %967 = vmatprep.subr.bf16.mxu0 0
        %968 = vmatpush1.bf16.msra.mxu0 %v679
        %969 = vmatprep.subr.bf16.mxu0 0
        %970 = vmatpush1.bf16.msra.mxu0 %v680
        %971 = vmatprep.subr.bf16.mxu0 0
        %972 = vmatpush1.bf16.msra.mxu0 %v681
        %973 = vmatprep.subr.bf16.mxu0 0
        %974 = vmatpush1.bf16.msra.mxu0 %v682
        %975 = vmatprep.subr.bf16.mxu0 0
        %976 = vmatpush1.bf16.msra.mxu0 %v683
        %977 = vmatprep.subr.bf16.mxu0 0
        %978 = vmatpush1.bf16.msra.mxu0 %v684
        %979 = vmatprep.subr.bf16.mxu0 0
        %980 = vmatpush1.bf16.msra.mxu0 %v685
        %981 = vmatprep.subr.bf16.mxu0 0
        %982 = vmatpush1.bf16.msra.mxu0 %v686
        %983 = vmatprep.subr.bf16.mxu0 0
        %984 = vmatpush1.bf16.msra.mxu0 %v687
        %985 = vmatprep.subr.bf16.mxu0 0
        %986 = vmatpush1.bf16.msra.mxu0 %v688
        %987 = vmatprep.subr.bf16.mxu0 0
        %988 = vmatpush1.bf16.msra.mxu0 %v689
        %989 = vmatprep.subr.bf16.mxu0 0
        %990 = vmatpush1.bf16.msra.mxu0 %v690
        %991 = vmatprep.subr.bf16.mxu0 0
        %992 = vmatpush1.bf16.msra.mxu0 %v691
        %993 = vmatprep.mubr.bf16.mxu0 %v294
        %994 = vmatmul.mubr.bf16.gmra.mrb[0].mxu0 %v293
        %v995 = vpop.f32.mrb[0].mxu0
        %v996 = vadd.f32 %v899, %v995
        %v997 = vpop.f32.mrb[0].mxu0
        %v998 = vpop.f32.mrb[0].mxu0
        %v999 = vadd.f32 %v902, %v998
        %v1000 = vpop.f32.mrb[0].mxu0
        %1001 = vmatprep.mubr.bf16.mxu0 %v301
        %1002 = vmatmul.mubr.bf16.gmra.mrb[0].mxu0 %v300
        %v1003 = vpop.f32.mrb[0].mxu0
        %v1004 = vadd.f32 %v907, %v1003
        %v1005 = vpop.f32.mrb[0].mxu0
        %v1006 = vpop.f32.mrb[0].mxu0
        %v1007 = vadd.f32 %v910, %v1006
        %v1008 = vpop.f32.mrb[0].mxu0
        %1009 = vmatprep.mubr.bf16.mxu0 %v308
        %1010 = vmatmul.mubr.bf16.gmra.mrb[0].mxu0 %v307
        %v1011 = vpop.f32.mrb[0].mxu0
        %v1012 = vadd.f32 %v915, %v1011
        %v1013 = vpop.f32.mrb[0].mxu0
        %v1014 = vpop.f32.mrb[0].mxu0
        %v1015 = vadd.f32 %v918, %v1014
        %v1016 = vpop.f32.mrb[0].mxu0
        %1017 = vmatprep.mubr.bf16.mxu0 %v315
        %1018 = vmatmul.mubr.bf16.gmra.mrb[0].mxu0 %v314
        %v1019 = vpop.f32.mrb[0].mxu0
        %v1020 = vadd.f32 %v923, %v1019
        %v1021 = vpop.f32.mrb[0].mxu0
        %v1022 = vpop.f32.mrb[0].mxu0
        %v1023 = vadd.f32 %v926, %v1022
        %v1024 = vpop.f32.mrb[0].mxu0
        %1025 = vmatprep.mubr.bf16.mxu0 %v322
        %1026 = vmatmul.mubr.bf16.gmra.mrb[0].mxu0 %v321
        %v1027 = vpop.f32.mrb[0].mxu0
        %v1028 = vadd.f32 %v931, %v1027
        %v1029 = vpop.f32.mrb[0].mxu0
        %v1030 = vpop.f32.mrb[0].mxu0
        %v1031 = vadd.f32 %v934, %v1030
        %v1032 = vpop.f32.mrb[0].mxu0
        %1033 = vmatprep.mubr.bf16.mxu0 %v329
        %1034 = vmatmul.mubr.bf16.gmra.mrb[0].mxu0 %v328
        %v1035 = vpop.f32.mrb[0].mxu0
        %v1036 = vadd.f32 %v939, %v1035
        %v1037 = vpop.f32.mrb[0].mxu0
        %v1038 = vpop.f32.mrb[0].mxu0
        %v1039 = vadd.f32 %v942, %v1038
        %v1040 = vpop.f32.mrb[0].mxu0
        %1041 = vmatprep.mubr.bf16.mxu0 %v336
        %1042 = vmatmul.mubr.bf16.gmra.mrb[0].mxu0 %v335
        %v1043 = vpop.f32.mrb[0].mxu0
        %v1044 = vadd.f32 %v947, %v1043
        %v1045 = vpop.f32.mrb[0].mxu0
        %v1046 = vpop.f32.mrb[0].mxu0
        %v1047 = vadd.f32 %v950, %v1046
        %v1048 = vpop.f32.mrb[0].mxu0
        %1049 = vmatprep.mubr.bf16.mxu0 %v343
        %1050 = vmatmul.mubr.bf16.gmra.mrb[0].mxu0 %v342
        %v1051 = vpop.f32.mrb[0].mxu0
        %v1052 = vadd.f32 %v955, %v1051
        %v1053 = vpop.f32.mrb[0].mxu0
        %v1054 = vpop.f32.mrb[0].mxu0
        %v1055 = vadd.f32 %v958, %v1054
        %v1056 = vpop.f32.mrb[0].mxu0
        %1057 = vdwg.mxu0
        %1058 = vmatprep.subr.bf16.mxu0 0
        %1059 = vmatpush1.bf16.msra.mxu0 %v692
        %1060 = vmatprep.subr.bf16.mxu0 0
        %1061 = vmatpush1.bf16.msra.mxu0 0
        %1062 = vmatprep.subr.bf16.mxu0 0
        %1063 = vmatpush1.bf16.msra.mxu0 0
        %1064 = vmatprep.subr.bf16.mxu0 0
        %1065 = vmatpush1.bf16.msra.mxu0 0
        %1066 = vmatprep.subr.bf16.mxu0 0
        %1067 = vmatpush1.bf16.msra.mxu0 0
        %1068 = vmatprep.subr.bf16.mxu0 0
        %1069 = vmatpush1.bf16.msra.mxu0 0
        %1070 = vmatprep.subr.bf16.mxu0 0
        %1071 = vmatpush1.bf16.msra.mxu0 0
        %1072 = vmatprep.subr.bf16.mxu0 0
        %1073 = vmatpush1.bf16.msra.mxu0 0
        %1074 = vmatprep.subr.bf16.mxu0 0
        %1075 = vmatpush1.bf16.msra.mxu0 0
        %1076 = vmatprep.subr.bf16.mxu0 0
        %1077 = vmatpush1.bf16.msra.mxu0 0
        %1078 = vmatprep.subr.bf16.mxu0 0
        %1079 = vmatpush1.bf16.msra.mxu0 0
        %1080 = vmatprep.subr.bf16.mxu0 0
        %1081 = vmatpush1.bf16.msra.mxu0 0
        %1082 = vmatprep.subr.bf16.mxu0 0
        %1083 = vmatpush1.bf16.msra.mxu0 0
        %1084 = vmatprep.subr.bf16.mxu0 0
        %1085 = vmatpush1.bf16.msra.mxu0 0
        %1086 = vmatprep.subr.bf16.mxu0 0
        %1087 = vmatpush1.bf16.msra.mxu0 0
        %1088 = vmatprep.subr.bf16.mxu0 0
        %1089 = vmatpush1.bf16.msra.mxu0 0
        %1090 = vmatprep.mubr.bf16.mxu0 0
        %1091 = vmatmul.mubr.bf16.gmra.mrb[0].mxu0 %v744
        %v1092 = vpop.f32.mrb[0].mxu0
        %v1093 = vadd.f32 %v996, %v1092
        %v1094 = vpop.f32.mrb[0].mxu0
        %v1095 = vpop.f32.mrb[0].mxu0
        %v1096 = vadd.f32 %v999, %v1095
        %v1097 = vpop.f32.mrb[0].mxu0
        %1098 = vmatprep.mubr.bf16.mxu0 0
        %1099 = vmatmul.mubr.bf16.gmra.mrb[0].mxu0 %v747
        %v1100 = vpop.f32.mrb[0].mxu0
        %v1101 = vadd.f32 %v1004, %v1100
        %v1102 = vpop.f32.mrb[0].mxu0
        %v1103 = vpop.f32.mrb[0].mxu0
        %v1104 = vadd.f32 %v1007, %v1103
        %v1105 = vpop.f32.mrb[0].mxu0
        %1106 = vmatprep.mubr.bf16.mxu0 0
        %1107 = vmatmul.mubr.bf16.gmra.mrb[0].mxu0 %v750
        %v1108 = vpop.f32.mrb[0].mxu0
        %v1109 = vadd.f32 %v1012, %v1108
        %v1110 = vpop.f32.mrb[0].mxu0
        %v1111 = vpop.f32.mrb[0].mxu0
        %v1112 = vadd.f32 %v1015, %v1111
        %v1113 = vpop.f32.mrb[0].mxu0
        %1114 = vmatprep.mubr.bf16.mxu0 0
        %1115 = vmatmul.mubr.bf16.gmra.mrb[0].mxu0 %v753
        %v1116 = vpop.f32.mrb[0].mxu0
        %v1117 = vadd.f32 %v1020, %v1116
        %v1118 = vpop.f32.mrb[0].mxu0
        %v1119 = vpop.f32.mrb[0].mxu0
        %v1120 = vadd.f32 %v1023, %v1119
        %v1121 = vpop.f32.mrb[0].mxu0
        %1122 = vmatprep.mubr.bf16.mxu0 0
        %1123 = vmatmul.mubr.bf16.gmra.mrb[0].mxu0 %v756
        %v1124 = vpop.f32.mrb[0].mxu0
        %v1125 = vadd.f32 %v1028, %v1124
        %v1126 = vpop.f32.mrb[0].mxu0
        %v1127 = vpop.f32.mrb[0].mxu0
        %v1128 = vadd.f32 %v1031, %v1127
        %v1129 = vpop.f32.mrb[0].mxu0
        %1130 = vmatprep.mubr.bf16.mxu0 0
        %1131 = vmatmul.mubr.bf16.gmra.mrb[0].mxu0 %v759
        %v1132 = vpop.f32.mrb[0].mxu0
        %v1133 = vadd.f32 %v1036, %v1132
        %v1134 = vpop.f32.mrb[0].mxu0
        %v1135 = vpop.f32.mrb[0].mxu0
        %v1136 = vadd.f32 %v1039, %v1135
        %v1137 = vpop.f32.mrb[0].mxu0
        %1138 = vmatprep.mubr.bf16.mxu0 0
        %1139 = vmatmul.mubr.bf16.gmra.mrb[0].mxu0 %v762
        %v1140 = vpop.f32.mrb[0].mxu0
        %v1141 = vadd.f32 %v1044, %v1140
        %v1142 = vpop.f32.mrb[0].mxu0
        %v1143 = vpop.f32.mrb[0].mxu0
        %v1144 = vadd.f32 %v1047, %v1143
        %v1145 = vpop.f32.mrb[0].mxu0
        %1146 = vmatprep.mubr.bf16.mxu0 0
        %1147 = vmatmul.mubr.bf16.gmra.mrb[0].mxu0 %v765
        %v1148 = vpop.f32.mrb[0].mxu0
        %v1149 = vadd.f32 %v1052, %v1148
        %v1150 = vpop.f32.mrb[0].mxu0
        %v1151 = vpop.f32.mrb[0].mxu0
        %v1152 = vadd.f32 %v1055, %v1151
        %v1153 = vpop.f32.mrb[0].mxu0
        %1154 = vdwg.mxu0
        %v1155 = vpack.c.bf16 %v1096, %v1093
        %v1156 = vpack.c.bf16 %v1104, %v1101
        %v1157 = vpack.c.bf16 %v1112, %v1109
        %v1158 = vpack.c.bf16 %v1120, %v1117
        %v1159 = vpack.c.bf16 %v1128, %v1125
        %v1160 = vpack.c.bf16 %v1136, %v1133
        %v1161 = vpack.c.bf16 %v1144, %v1141
        %v1162 = vpack.c.bf16 %v1152, %v1149
        %v1163 = vmax.bf16 %v1155, 0
        %v1164 = vmax.bf16 %v1156, 0
        %v1165 = vmax.bf16 %v1157, 0
        %v1166 = vmax.bf16 %v1158, 0
        %v1167 = vmax.bf16 %v1159, 0
        %v1168 = vmax.bf16 %v1160, 0
        %v1169 = vmax.bf16 %v1161, 0
        %v1170 = vmax.bf16 %v1162, 0
        %v1171 = vld [vmem:[%s1 + $0x188] sm:$0xf]
        %v1172 = vld [vmem:[%s1 + $0x18c] sm:$0xf]
        %v1173 = vld [vmem:[%s1 + $0x190] sm:$0xf]
        %v1174 = vld [vmem:[%s1 + $0x194] sm:$0xf]
        %v1175 = vld [vmem:[%s1 + $0x198] sm:$0xf]
        %v1176 = vld [vmem:[%s1 + $0x19c] sm:$0xf]
        %v1177 = vld [vmem:[%s1 + $0x1a0] sm:$0xf]
        %v1178 = vld [vmem:[%s1 + $0x1a4] sm:$0xf]
        %v1179 = vld [vmem:[%s1 + $0x1a8] sm:$0xf]
        %v1180 = vld [vmem:[%s1 + $0x1ac] sm:$0xf]
        %v1181 = vld [vmem:[%s1 + $0x1b0] sm:$0xf]
        %v1182 = vld [vmem:[%s1 + $0x1b4] sm:$0xf]
        %v1183 = vld [vmem:[%s1 + $0x1b8] sm:$0xf]
        %v1184 = vld [vmem:[%s1 + $0x1bc] sm:$0xf]
        %v1185 = vld [vmem:[%s1 + $0x1c0] sm:$0xf]
        %v1186 = vld [vmem:[%s1 + $0x1c4] sm:$0xf]
        %v1187 = vld [vmem:[%s2 + $0x1] sm:$0x1]
        %v1188 = vlaneseq
        %v1189 = vshrl.u32 %v1188, 7
        %v1190 = vsub.s32 0, %v1189
        %v1191 = vrot.slane %v1187, %v1190
        %v1208 = vunpack.c.l.b16 %v1171
        %v1209 = vunpack.c.l.b16 %v1172
        %v1210 = vunpack.c.l.b16 %v1173
        %v1211 = vunpack.c.l.b16 %v1174
        %v1212 = vunpack.c.l.b16 %v1175
        %v1213 = vunpack.c.l.b16 %v1176
        %v1214 = vunpack.c.l.b16 %v1177
        %v1215 = vunpack.c.l.b16 %v1178
        %v1216 = vunpack.c.l.b16 %v1179
        %v1217 = vunpack.c.l.b16 %v1180
        %v1218 = vunpack.c.l.b16 %v1181
        %v1219 = vunpack.c.l.b16 %v1182
        %v1220 = vunpack.c.l.b16 %v1183
        %v1221 = vunpack.c.l.b16 %v1184
        %v1222 = vunpack.c.l.b16 %v1185
        %v1223 = vunpack.c.l.b16 %v1186
        %v1224 = vpack.c.b16 %v1209, %v1208
        %v1225 = vpack.c.b16 %v1211, %v1210
        %v1226 = vpack.c.b16 %v1213, %v1212
        %v1227 = vpack.c.b16 %v1215, %v1214
        %v1228 = vpack.c.b16 %v1217, %v1216
        %v1229 = vpack.c.b16 %v1219, %v1218
        %v1230 = vpack.c.b16 %v1221, %v1220
        %v1231 = vpack.c.b16 %v1223, %v1222
        %1240 = vmatprep.subr.bf16.mxu0 0
        %1241 = vmatpush1.bf16.msra.mxu0 %v1224
        %1242 = vmatprep.subr.bf16.mxu0 0
        %1243 = vmatpush1.bf16.msra.mxu0 %v1225
        %1244 = vmatprep.subr.bf16.mxu0 0
        %1245 = vmatpush1.bf16.msra.mxu0 %v1226
        %1246 = vmatprep.subr.bf16.mxu0 0
        %1247 = vmatpush1.bf16.msra.mxu0 %v1227
        %1248 = vmatprep.subr.bf16.mxu0 0
        %1249 = vmatpush1.bf16.msra.mxu0 %v1228
        %1250 = vmatprep.subr.bf16.mxu0 0
        %1251 = vmatpush1.bf16.msra.mxu0 %v1229
        %1252 = vmatprep.subr.bf16.mxu0 0
        %1253 = vmatpush1.bf16.msra.mxu0 %v1230
        %1254 = vmatprep.subr.bf16.mxu0 0
        %1255 = vmatpush1.bf16.msra.mxu0 %v1231
        %1256 = vmatprep.subr.bf16.mxu0 0
        %1257 = vmatpush1.bf16.msra.mxu0 0
        %1258 = vmatprep.subr.bf16.mxu0 0
        %1259 = vmatpush1.bf16.msra.mxu0 0
        %1260 = vmatprep.subr.bf16.mxu0 0
        %1261 = vmatpush1.bf16.msra.mxu0 0
        %1262 = vmatprep.subr.bf16.mxu0 0
        %1263 = vmatpush1.bf16.msra.mxu0 0
        %1264 = vmatprep.subr.bf16.mxu0 0
        %1265 = vmatpush1.bf16.msra.mxu0 0
        %1266 = vmatprep.subr.bf16.mxu0 0
        %1267 = vmatpush1.bf16.msra.mxu0 0
        %1268 = vmatprep.subr.bf16.mxu0 0
        %1269 = vmatpush1.bf16.msra.mxu0 0
        %1270 = vmatprep.subr.bf16.mxu0 0
        %1271 = vmatpush1.bf16.msra.mxu0 0
        %1272 = vmatprep.mubr.bf16.mxu0 0
        %1273 = vmatmul.mubr.bf16.gmra.mrb[0].mxu0 %v1163
        %v1274 = vpop.f32.mrb[0].mxu0
        %v1275 = vadd.f32 %v1191, %v1274
        %v1276 = vpop.f32.mrb[0].mxu0
        %v1277 = vpop.f32.mrb[0].mxu0
        %v1278 = vadd.f32 %v1191, %v1277
        %v1279 = vpop.f32.mrb[0].mxu0
        %1280 = vmatprep.mubr.bf16.mxu0 0
        %1281 = vmatmul.mubr.bf16.gmra.mrb[0].mxu0 %v1164
        %v1282 = vpop.f32.mrb[0].mxu0
        %v1283 = vadd.f32 %v1191, %v1282
        %v1284 = vpop.f32.mrb[0].mxu0
        %v1285 = vpop.f32.mrb[0].mxu0
        %v1286 = vadd.f32 %v1191, %v1285
        %v1287 = vpop.f32.mrb[0].mxu0
        %1288 = vmatprep.mubr.bf16.mxu0 0
        %1289 = vmatmul.mubr.bf16.gmra.mrb[0].mxu0 %v1165
        %v1290 = vpop.f32.mrb[0].mxu0
        %v1291 = vadd.f32 %v1191, %v1290
        %v1292 = vpop.f32.mrb[0].mxu0
        %v1293 = vpop.f32.mrb[0].mxu0
        %v1294 = vadd.f32 %v1191, %v1293
        %v1295 = vpop.f32.mrb[0].mxu0
        %1296 = vmatprep.mubr.bf16.mxu0 0
        %1297 = vmatmul.mubr.bf16.gmra.mrb[0].mxu0 %v1166
        %v1298 = vpop.f32.mrb[0].mxu0
        %v1299 = vadd.f32 %v1191, %v1298
        %v1300 = vpop.f32.mrb[0].mxu0
        %v1301 = vpop.f32.mrb[0].mxu0
        %v1302 = vadd.f32 %v1191, %v1301
        %v1303 = vpop.f32.mrb[0].mxu0
        %1304 = vmatprep.mubr.bf16.mxu0 0
        %1305 = vmatmul.mubr.bf16.gmra.mrb[0].mxu0 %v1167
        %v1306 = vpop.f32.mrb[0].mxu0
        %v1307 = vadd.f32 %v1191, %v1306
        %v1308 = vpop.f32.mrb[0].mxu0
        %v1309 = vpop.f32.mrb[0].mxu0
        %v1310 = vadd.f32 %v1191, %v1309
        %v1311 = vpop.f32.mrb[0].mxu0
        %1312 = vmatprep.mubr.bf16.mxu0 0
        %1313 = vmatmul.mubr.bf16.gmra.mrb[0].mxu0 %v1168
        %v1314 = vpop.f32.mrb[0].mxu0
        %v1315 = vadd.f32 %v1191, %v1314
        %v1316 = vpop.f32.mrb[0].mxu0
        %v1317 = vpop.f32.mrb[0].mxu0
        %v1318 = vadd.f32 %v1191, %v1317
        %v1319 = vpop.f32.mrb[0].mxu0
        %1320 = vmatprep.mubr.bf16.mxu0 0
        %1321 = vmatmul.mubr.bf16.gmra.mrb[0].mxu0 %v1169
        %v1322 = vpop.f32.mrb[0].mxu0
        %v1323 = vadd.f32 %v1191, %v1322
        %v1324 = vpop.f32.mrb[0].mxu0
        %v1325 = vpop.f32.mrb[0].mxu0
        %v1326 = vadd.f32 %v1191, %v1325
        %v1327 = vpop.f32.mrb[0].mxu0
        %1328 = vmatprep.mubr.bf16.mxu0 0
        %1329 = vmatmul.mubr.bf16.gmra.mrb[0].mxu0 %v1170
        %v1330 = vpop.f32.mrb[0].mxu0
        %v1331 = vadd.f32 %v1191, %v1330
        %v1332 = vpop.f32.mrb[0].mxu0
        %v1333 = vpop.f32.mrb[0].mxu0
        %v1334 = vadd.f32 %v1191, %v1333
        %v1335 = vpop.f32.mrb[0].mxu0
        %1336 = vdwg.mxu0
        %v1337 = vpack.c.bf16 %v1278, %v1275
        %v1338 = vpack.c.bf16 %v1286, %v1283
        %v1339 = vpack.c.bf16 %v1294, %v1291
        %v1340 = vpack.c.bf16 %v1302, %v1299
        %v1341 = vpack.c.bf16 %v1310, %v1307
        %v1342 = vpack.c.bf16 %v1318, %v1315
        %v1343 = vpack.c.bf16 %v1326, %v1323
        %v1344 = vpack.c.bf16 %v1334, %v1331
        %v1345 = vmax.bf16 %v1337, 0
        %v1346 = vmax.bf16 %v1338, 0
        %v1347 = vmax.bf16 %v1339, 0
        %v1348 = vmax.bf16 %v1340, 0
        %v1349 = vmax.bf16 %v1341, 0
        %v1350 = vmax.bf16 %v1342, 0
        %v1351 = vmax.bf16 %v1343, 0
        %v1352 = vmax.bf16 %v1344, 0
        %v1353 = vld [vmem:[%s1 + $0x1c8] sm:$0xf]
        %v1354 = vld [vmem:[%s1 + $0x1cc] sm:$0xf]
        %v1355 = vld [vmem:[%s1 + $0x1d0] sm:$0xf]
        %v1356 = vld [vmem:[%s1 + $0x1d4] sm:$0xf]
        %v1357 = vld [vmem:[%s1 + $0x1d8] sm:$0xf]
        %v1358 = vld [vmem:[%s1 + $0x1dc] sm:$0xf]
        %v1359 = vld [vmem:[%s1 + $0x1e0] sm:$0xf]
        %v1360 = vld [vmem:[%s1 + $0x1e4] sm:$0xf]
        %v1361 = vld [vmem:[%s1 + $0x1e8] sm:$0xf]
        %v1362 = vld [vmem:[%s1 + $0x1ec] sm:$0xf]
        %v1363 = vld [vmem:[%s1 + $0x1f0] sm:$0xf]
        %v1364 = vld [vmem:[%s1 + $0x1f4] sm:$0xf]
        %v1365 = vld [vmem:[%s1 + $0x1f8] sm:$0xf]
        %v1366 = vld [vmem:[%s1 + $0x1fc] sm:$0xf]
        %v1367 = vld [vmem:[%s1 + $0x200] sm:$0xf]
        %v1368 = vld [vmem:[%s1 + $0x204] sm:$0xf]
        %v1369 = vld [vmem:[%s2 + $0x2] sm:$0x1]
        %v1370 = vlaneseq
        %v1371 = vshrl.u32 %v1370, 7
        %v1372 = vsub.s32 0, %v1371
        %v1373 = vrot.slane %v1369, %v1372
        %v1390 = vunpack.c.l.b16 %v1353
        %v1391 = vunpack.c.l.b16 %v1354
        %v1392 = vunpack.c.l.b16 %v1355
        %v1393 = vunpack.c.l.b16 %v1356
        %v1394 = vunpack.c.l.b16 %v1357
        %v1395 = vunpack.c.l.b16 %v1358
        %v1396 = vunpack.c.l.b16 %v1359
        %v1397 = vunpack.c.l.b16 %v1360
        %v1398 = vunpack.c.l.b16 %v1361
        %v1399 = vunpack.c.l.b16 %v1362
        %v1400 = vunpack.c.l.b16 %v1363
        %v1401 = vunpack.c.l.b16 %v1364
        %v1402 = vunpack.c.l.b16 %v1365
        %v1403 = vunpack.c.l.b16 %v1366
        %v1404 = vunpack.c.l.b16 %v1367
        %v1405 = vunpack.c.l.b16 %v1368
        %v1406 = vpack.c.b16 %v1391, %v1390
        %v1407 = vpack.c.b16 %v1393, %v1392
        %v1408 = vpack.c.b16 %v1395, %v1394
        %v1409 = vpack.c.b16 %v1397, %v1396
        %v1410 = vpack.c.b16 %v1399, %v1398
        %v1411 = vpack.c.b16 %v1401, %v1400
        %v1412 = vpack.c.b16 %v1403, %v1402
        %v1413 = vpack.c.b16 %v1405, %v1404
        %1422 = vmatprep.subr.bf16.mxu0 0
        %1423 = vmatpush1.bf16.msra.mxu0 %v1406
        %1424 = vmatprep.subr.bf16.mxu0 0
        %1425 = vmatpush1.bf16.msra.mxu0 %v1407
        %1426 = vmatprep.subr.bf16.mxu0 0
        %1427 = vmatpush1.bf16.msra.mxu0 %v1408
        %1428 = vmatprep.subr.bf16.mxu0 0
        %1429 = vmatpush1.bf16.msra.mxu0 %v1409
        %1430 = vmatprep.subr.bf16.mxu0 0
        %1431 = vmatpush1.bf16.msra.mxu0 %v1410
        %1432 = vmatprep.subr.bf16.mxu0 0
        %1433 = vmatpush1.bf16.msra.mxu0 %v1411
        %1434 = vmatprep.subr.bf16.mxu0 0
        %1435 = vmatpush1.bf16.msra.mxu0 %v1412
        %1436 = vmatprep.subr.bf16.mxu0 0
        %1437 = vmatpush1.bf16.msra.mxu0 %v1413
        %1438 = vmatprep.subr.bf16.mxu0 0
        %1439 = vmatpush1.bf16.msra.mxu0 0
        %1440 = vmatprep.subr.bf16.mxu0 0
        %1441 = vmatpush1.bf16.msra.mxu0 0
        %1442 = vmatprep.subr.bf16.mxu0 0
        %1443 = vmatpush1.bf16.msra.mxu0 0
        %1444 = vmatprep.subr.bf16.mxu0 0
        %1445 = vmatpush1.bf16.msra.mxu0 0
        %1446 = vmatprep.subr.bf16.mxu0 0
        %1447 = vmatpush1.bf16.msra.mxu0 0
        %1448 = vmatprep.subr.bf16.mxu0 0
        %1449 = vmatpush1.bf16.msra.mxu0 0
        %1450 = vmatprep.subr.bf16.mxu0 0
        %1451 = vmatpush1.bf16.msra.mxu0 0
        %1452 = vmatprep.subr.bf16.mxu0 0
        %1453 = vmatpush1.bf16.msra.mxu0 0
        %1454 = vmatprep.mubr.bf16.mxu0 0
        %1455 = vmatmul.mubr.bf16.gmra.mrb[0].mxu0 %v1345
        %v1456 = vpop.f32.mrb[0].mxu0
        %v1457 = vadd.f32 %v1373, %v1456
        %v1458 = vpop.f32.mrb[0].mxu0
        %v1459 = vpop.f32.mrb[0].mxu0
        %v1460 = vadd.f32 %v1373, %v1459
        %v1461 = vpop.f32.mrb[0].mxu0
        %1462 = vmatprep.mubr.bf16.mxu0 0
        %1463 = vmatmul.mubr.bf16.gmra.mrb[0].mxu0 %v1346
        %v1464 = vpop.f32.mrb[0].mxu0
        %v1465 = vadd.f32 %v1373, %v1464
        %v1466 = vpop.f32.mrb[0].mxu0
        %v1467 = vpop.f32.mrb[0].mxu0
        %v1468 = vadd.f32 %v1373, %v1467
        %v1469 = vpop.f32.mrb[0].mxu0
        %1470 = vmatprep.mubr.bf16.mxu0 0
        %1471 = vmatmul.mubr.bf16.gmra.mrb[0].mxu0 %v1347
        %v1472 = vpop.f32.mrb[0].mxu0
        %v1473 = vadd.f32 %v1373, %v1472
        %v1474 = vpop.f32.mrb[0].mxu0
        %v1475 = vpop.f32.mrb[0].mxu0
        %v1476 = vadd.f32 %v1373, %v1475
        %v1477 = vpop.f32.mrb[0].mxu0
        %1478 = vmatprep.mubr.bf16.mxu0 0
        %1479 = vmatmul.mubr.bf16.gmra.mrb[0].mxu0 %v1348
        %v1480 = vpop.f32.mrb[0].mxu0
        %v1481 = vadd.f32 %v1373, %v1480
        %v1482 = vpop.f32.mrb[0].mxu0
        %v1483 = vpop.f32.mrb[0].mxu0
        %v1484 = vadd.f32 %v1373, %v1483
        %v1485 = vpop.f32.mrb[0].mxu0
        %1486 = vmatprep.mubr.bf16.mxu0 0
        %1487 = vmatmul.mubr.bf16.gmra.mrb[0].mxu0 %v1349
        %v1488 = vpop.f32.mrb[0].mxu0
        %v1489 = vadd.f32 %v1373, %v1488
        %v1490 = vpop.f32.mrb[0].mxu0
        %v1491 = vpop.f32.mrb[0].mxu0
        %v1492 = vadd.f32 %v1373, %v1491
        %v1493 = vpop.f32.mrb[0].mxu0
        %1494 = vmatprep.mubr.bf16.mxu0 0
        %1495 = vmatmul.mubr.bf16.gmra.mrb[0].mxu0 %v1350
        %v1496 = vpop.f32.mrb[0].mxu0
        %v1497 = vadd.f32 %v1373, %v1496
        %v1498 = vpop.f32.mrb[0].mxu0
        %v1499 = vpop.f32.mrb[0].mxu0
        %v1500 = vadd.f32 %v1373, %v1499
        %v1501 = vpop.f32.mrb[0].mxu0
        %1502 = vmatprep.mubr.bf16.mxu0 0
        %1503 = vmatmul.mubr.bf16.gmra.mrb[0].mxu0 %v1351
        %v1504 = vpop.f32.mrb[0].mxu0
        %v1505 = vadd.f32 %v1373, %v1504
        %v1506 = vpop.f32.mrb[0].mxu0
        %v1507 = vpop.f32.mrb[0].mxu0
        %v1508 = vadd.f32 %v1373, %v1507
        %v1509 = vpop.f32.mrb[0].mxu0
        %1510 = vmatprep.mubr.bf16.mxu0 0
        %1511 = vmatmul.mubr.bf16.gmra.mrb[0].mxu0 %v1352
        %v1512 = vpop.f32.mrb[0].mxu0
        %v1513 = vadd.f32 %v1373, %v1512
        %v1514 = vpop.f32.mrb[0].mxu0
        %v1515 = vpop.f32.mrb[0].mxu0
        %v1516 = vadd.f32 %v1373, %v1515
        %v1517 = vpop.f32.mrb[0].mxu0
        %1518 = vdwg.mxu0
        %v1519 = vpack.c.bf16 %v1460, %v1457
        %v1520 = vpack.c.bf16 %v1468, %v1465
        %v1521 = vpack.c.bf16 %v1476, %v1473
        %v1522 = vpack.c.bf16 %v1484, %v1481
        %v1523 = vpack.c.bf16 %v1492, %v1489
        %v1524 = vpack.c.bf16 %v1500, %v1497
        %v1525 = vpack.c.bf16 %v1508, %v1505
        %v1526 = vpack.c.bf16 %v1516, %v1513
        %vm1527 = vcmp.gt.bf16.partialorder %v1519, 0
        %vm1528 = vcmp.gt.bf16.partialorder %v1520, 0
        %vm1529 = vcmp.gt.bf16.partialorder %v1521, 0
        %vm1530 = vcmp.gt.bf16.partialorder %v1522, 0
        %vm1531 = vcmp.gt.bf16.partialorder %v1523, 0
        %vm1532 = vcmp.gt.bf16.partialorder %v1524, 0
        %vm1533 = vcmp.gt.bf16.partialorder %v1525, 0
        %vm1534 = vcmp.gt.bf16.partialorder %v1526, 0
        %v1535 = vmul.bf16 %v1519, 1009007652
        %v1536 = vmul.bf16 %v1520, 1009007652
        %v1537 = vmul.bf16 %v1521, 1009007652
        %v1538 = vmul.bf16 %v1522, 1009007652
        %v1539 = vmul.bf16 %v1523, 1009007652
        %v1540 = vmul.bf16 %v1524, 1009007652
        %v1541 = vmul.bf16 %v1525, 1009007652
        %v1542 = vmul.bf16 %v1526, 1009007652
        %v1543 = vsel %vm1527, %v1519, %v1535
        %v1544 = vsel %vm1528, %v1520, %v1536
        %v1545 = vsel %vm1529, %v1521, %v1537
        %v1546 = vsel %vm1530, %v1522, %v1538
        %v1547 = vsel %vm1531, %v1523, %v1539
        %v1548 = vsel %vm1532, %v1524, %v1540
        %v1549 = vsel %vm1533, %v1525, %v1541
        %v1550 = vsel %vm1534, %v1526, %v1542
        %v1551 = vld [vmem:[%s1 + $0x208] sm:$0xf]
        %v1552 = vld [vmem:[%s1 + $0x20c] sm:$0xf]
        %v1553 = vld [vmem:[%s1 + $0x210] sm:$0xf]
        %v1554 = vld [vmem:[%s1 + $0x214] sm:$0xf]
        %v1555 = vld [vmem:[%s1 + $0x218] sm:$0xf]
        %v1556 = vld [vmem:[%s1 + $0x21c] sm:$0xf]
        %v1557 = vld [vmem:[%s1 + $0x220] sm:$0xf]
        %v1558 = vld [vmem:[%s1 + $0x224] sm:$0xf]
        %v1559 = vld [vmem:[%s1 + $0x228] sm:$0xf]
        %v1560 = vld [vmem:[%s1 + $0x22c] sm:$0xf]
        %v1561 = vld [vmem:[%s1 + $0x230] sm:$0xf]
        %v1562 = vld [vmem:[%s1 + $0x234] sm:$0xf]
        %v1563 = vld [vmem:[%s1 + $0x238] sm:$0xf]
        %v1564 = vld [vmem:[%s1 + $0x23c] sm:$0xf]
        %v1565 = vld [vmem:[%s1 + $0x240] sm:$0xf]
        %v1566 = vld [vmem:[%s1 + $0x244] sm:$0xf]
        %v1567 = vld [vmem:[%s2 + $0x3] sm:$0x1]
        %v1568 = vlaneseq
        %v1569 = vshrl.u32 %v1568, 7
        %v1570 = vsub.s32 0, %v1569
        %v1571 = vrot.slane %v1567, %v1570
        %v1588 = vunpack.c.l.b16 %v1551
        %v1589 = vunpack.c.l.b16 %v1552
        %v1590 = vunpack.c.l.b16 %v1553
        %v1591 = vunpack.c.l.b16 %v1554
        %v1592 = vunpack.c.l.b16 %v1555
        %v1593 = vunpack.c.l.b16 %v1556
        %v1594 = vunpack.c.l.b16 %v1557
        %v1595 = vunpack.c.l.b16 %v1558
        %v1596 = vunpack.c.l.b16 %v1559
        %v1597 = vunpack.c.l.b16 %v1560
        %v1598 = vunpack.c.l.b16 %v1561
        %v1599 = vunpack.c.l.b16 %v1562
        %v1600 = vunpack.c.l.b16 %v1563
        %v1601 = vunpack.c.l.b16 %v1564
        %v1602 = vunpack.c.l.b16 %v1565
        %v1603 = vunpack.c.l.b16 %v1566
        %v1604 = vpack.c.b16 %v1589, %v1588
        %v1605 = vpack.c.b16 %v1591, %v1590
        %v1606 = vpack.c.b16 %v1593, %v1592
        %v1607 = vpack.c.b16 %v1595, %v1594
        %v1608 = vpack.c.b16 %v1597, %v1596
        %v1609 = vpack.c.b16 %v1599, %v1598
        %v1610 = vpack.c.b16 %v1601, %v1600
        %v1611 = vpack.c.b16 %v1603, %v1602
        %1620 = vmatprep.subr.bf16.mxu0 0
        %1621 = vmatpush1.bf16.msra.mxu0 %v1604
        %1622 = vmatprep.subr.bf16.mxu0 0
        %1623 = vmatpush1.bf16.msra.mxu0 %v1605
        %1624 = vmatprep.subr.bf16.mxu0 0
        %1625 = vmatpush1.bf16.msra.mxu0 %v1606
        %1626 = vmatprep.subr.bf16.mxu0 0
        %1627 = vmatpush1.bf16.msra.mxu0 %v1607
        %1628 = vmatprep.subr.bf16.mxu0 0
        %1629 = vmatpush1.bf16.msra.mxu0 %v1608
        %1630 = vmatprep.subr.bf16.mxu0 0
        %1631 = vmatpush1.bf16.msra.mxu0 %v1609
        %1632 = vmatprep.subr.bf16.mxu0 0
        %1633 = vmatpush1.bf16.msra.mxu0 %v1610
        %1634 = vmatprep.subr.bf16.mxu0 0
        %1635 = vmatpush1.bf16.msra.mxu0 %v1611
        %1636 = vmatprep.subr.bf16.mxu0 0
        %1637 = vmatpush1.bf16.msra.mxu0 0
        %1638 = vmatprep.subr.bf16.mxu0 0
        %1639 = vmatpush1.bf16.msra.mxu0 0
        %1640 = vmatprep.subr.bf16.mxu0 0
        %1641 = vmatpush1.bf16.msra.mxu0 0
        %1642 = vmatprep.subr.bf16.mxu0 0
        %1643 = vmatpush1.bf16.msra.mxu0 0
        %1644 = vmatprep.subr.bf16.mxu0 0
        %1645 = vmatpush1.bf16.msra.mxu0 0
        %1646 = vmatprep.subr.bf16.mxu0 0
        %1647 = vmatpush1.bf16.msra.mxu0 0
        %1648 = vmatprep.subr.bf16.mxu0 0
        %1649 = vmatpush1.bf16.msra.mxu0 0
        %1650 = vmatprep.subr.bf16.mxu0 0
        %1651 = vmatpush1.bf16.msra.mxu0 0
        %1652 = vmatprep.mubr.bf16.mxu0 0
        %1653 = vmatmul.mubr.bf16.gmra.mrb[0].mxu0 %v1543
        %v1654 = vpop.f32.mrb[0].mxu0
        %v1655 = vadd.f32 %v1571, %v1654
        %v1656 = vpop.f32.mrb[0].mxu0
        %v1657 = vpop.f32.mrb[0].mxu0
        %v1658 = vadd.f32 %v1571, %v1657
        %v1659 = vpop.f32.mrb[0].mxu0
        %1660 = vmatprep.mubr.bf16.mxu0 0
        %1661 = vmatmul.mubr.bf16.gmra.mrb[0].mxu0 %v1544
        %v1662 = vpop.f32.mrb[0].mxu0
        %v1663 = vadd.f32 %v1571, %v1662
        %v1664 = vpop.f32.mrb[0].mxu0
        %v1665 = vpop.f32.mrb[0].mxu0
        %v1666 = vadd.f32 %v1571, %v1665
        %v1667 = vpop.f32.mrb[0].mxu0
        %1668 = vmatprep.mubr.bf16.mxu0 0
        %1669 = vmatmul.mubr.bf16.gmra.mrb[0].mxu0 %v1545
        %v1670 = vpop.f32.mrb[0].mxu0
        %v1671 = vadd.f32 %v1571, %v1670
        %v1672 = vpop.f32.mrb[0].mxu0
        %v1673 = vpop.f32.mrb[0].mxu0
        %v1674 = vadd.f32 %v1571, %v1673
        %v1675 = vpop.f32.mrb[0].mxu0
        %1676 = vmatprep.mubr.bf16.mxu0 0
        %1677 = vmatmul.mubr.bf16.gmra.mrb[0].mxu0 %v1546
        %v1678 = vpop.f32.mrb[0].mxu0
        %v1679 = vadd.f32 %v1571, %v1678
        %v1680 = vpop.f32.mrb[0].mxu0
        %v1681 = vpop.f32.mrb[0].mxu0
        %v1682 = vadd.f32 %v1571, %v1681
        %v1683 = vpop.f32.mrb[0].mxu0
        %1684 = vmatprep.mubr.bf16.mxu0 0
        %1685 = vmatmul.mubr.bf16.gmra.mrb[0].mxu0 %v1547
        %v1686 = vpop.f32.mrb[0].mxu0
        %v1687 = vadd.f32 %v1571, %v1686
        %v1688 = vpop.f32.mrb[0].mxu0
        %v1689 = vpop.f32.mrb[0].mxu0
        %v1690 = vadd.f32 %v1571, %v1689
        %v1691 = vpop.f32.mrb[0].mxu0
        %1692 = vmatprep.mubr.bf16.mxu0 0
        %1693 = vmatmul.mubr.bf16.gmra.mrb[0].mxu0 %v1548
        %v1694 = vpop.f32.mrb[0].mxu0
        %v1695 = vadd.f32 %v1571, %v1694
        %v1696 = vpop.f32.mrb[0].mxu0
        %v1697 = vpop.f32.mrb[0].mxu0
        %v1698 = vadd.f32 %v1571, %v1697
        %v1699 = vpop.f32.mrb[0].mxu0
        %1700 = vmatprep.mubr.bf16.mxu0 0
        %1701 = vmatmul.mubr.bf16.gmra.mrb[0].mxu0 %v1549
        %v1702 = vpop.f32.mrb[0].mxu0
        %v1703 = vadd.f32 %v1571, %v1702
        %v1704 = vpop.f32.mrb[0].mxu0
        %v1705 = vpop.f32.mrb[0].mxu0
        %v1706 = vadd.f32 %v1571, %v1705
        %v1707 = vpop.f32.mrb[0].mxu0
        %1708 = vmatprep.mubr.bf16.mxu0 0
        %1709 = vmatmul.mubr.bf16.gmra.mrb[0].mxu0 %v1550
        %v1710 = vpop.f32.mrb[0].mxu0
        %v1711 = vadd.f32 %v1571, %v1710
        %v1712 = vpop.f32.mrb[0].mxu0
        %v1713 = vpop.f32.mrb[0].mxu0
        %v1714 = vadd.f32 %v1571, %v1713
        %v1715 = vpop.f32.mrb[0].mxu0
        %1716 = vdwg.mxu0
        %v1717 = vpack.c.bf16 %v1658, %v1655
        %v1718 = vpack.c.bf16 %v1666, %v1663
        %v1719 = vpack.c.bf16 %v1674, %v1671
        %v1720 = vpack.c.bf16 %v1682, %v1679
        %v1721 = vpack.c.bf16 %v1690, %v1687
        %v1722 = vpack.c.bf16 %v1698, %v1695
        %v1723 = vpack.c.bf16 %v1706, %v1703
        %v1724 = vpack.c.bf16 %v1714, %v1711
        %v1725 = vmax.bf16 %v1717, 0
        %v1726 = vmax.bf16 %v1718, 0
        %v1727 = vmax.bf16 %v1719, 0
        %v1728 = vmax.bf16 %v1720, 0
        %v1729 = vmax.bf16 %v1721, 0
        %v1730 = vmax.bf16 %v1722, 0
        %v1731 = vmax.bf16 %v1723, 0
        %v1732 = vmax.bf16 %v1724, 0
        %v1733 = vld [vmem:[%s1 + $0x248] sm:$0xf]
        %v1734 = vld [vmem:[%s1 + $0x24c] sm:$0xf]
        %v1735 = vld [vmem:[%s1 + $0x250] sm:$0xf]
        %v1736 = vld [vmem:[%s1 + $0x254] sm:$0xf]
        %v1737 = vld [vmem:[%s1 + $0x258] sm:$0xf]
        %v1738 = vld [vmem:[%s1 + $0x25c] sm:$0xf]
        %v1739 = vld [vmem:[%s1 + $0x260] sm:$0xf]
        %v1740 = vld [vmem:[%s1 + $0x264] sm:$0xf]
        %v1741 = vld [vmem:[%s1 + $0x268] sm:$0xf]
        %v1742 = vld [vmem:[%s1 + $0x26c] sm:$0xf]
        %v1743 = vld [vmem:[%s1 + $0x270] sm:$0xf]
        %v1744 = vld [vmem:[%s1 + $0x274] sm:$0xf]
        %v1745 = vld [vmem:[%s1 + $0x278] sm:$0xf]
        %v1746 = vld [vmem:[%s1 + $0x27c] sm:$0xf]
        %v1747 = vld [vmem:[%s1 + $0x280] sm:$0xf]
        %v1748 = vld [vmem:[%s1 + $0x284] sm:$0xf]
        %v1749 = vld [vmem:[%s2 + $0x4] sm:$0x1]
        %v1750 = vlaneseq
        %v1751 = vshrl.u32 %v1750, 7
        %v1752 = vsub.s32 0, %v1751
        %v1753 = vrot.slane %v1749, %v1752
        %v1770 = vunpack.c.l.b16 %v1733
        %v1771 = vunpack.c.l.b16 %v1734
        %v1772 = vunpack.c.l.b16 %v1735
        %v1773 = vunpack.c.l.b16 %v1736
        %v1774 = vunpack.c.l.b16 %v1737
        %v1775 = vunpack.c.l.b16 %v1738
        %v1776 = vunpack.c.l.b16 %v1739
        %v1777 = vunpack.c.l.b16 %v1740
        %v1778 = vunpack.c.l.b16 %v1741
        %v1779 = vunpack.c.l.b16 %v1742
        %v1780 = vunpack.c.l.b16 %v1743
        %v1781 = vunpack.c.l.b16 %v1744
        %v1782 = vunpack.c.l.b16 %v1745
        %v1783 = vunpack.c.l.b16 %v1746
        %v1784 = vunpack.c.l.b16 %v1747
        %v1785 = vunpack.c.l.b16 %v1748
        %v1786 = vpack.c.b16 %v1771, %v1770
        %v1787 = vpack.c.b16 %v1773, %v1772
        %v1788 = vpack.c.b16 %v1775, %v1774
        %v1789 = vpack.c.b16 %v1777, %v1776
        %v1790 = vpack.c.b16 %v1779, %v1778
        %v1791 = vpack.c.b16 %v1781, %v1780
        %v1792 = vpack.c.b16 %v1783, %v1782
        %v1793 = vpack.c.b16 %v1785, %v1784
        %1802 = vmatprep.subr.bf16.mxu0 0
        %1803 = vmatpush1.bf16.msra.mxu0 %v1786
        %1804 = vmatprep.subr.bf16.mxu0 0
        %1805 = vmatpush1.bf16.msra.mxu0 %v1787
        %1806 = vmatprep.subr.bf16.mxu0 0
        %1807 = vmatpush1.bf16.msra.mxu0 %v1788
        %1808 = vmatprep.subr.bf16.mxu0 0
        %1809 = vmatpush1.bf16.msra.mxu0 %v1789
        %1810 = vmatprep.subr.bf16.mxu0 0
        %1811 = vmatpush1.bf16.msra.mxu0 %v1790
        %1812 = vmatprep.subr.bf16.mxu0 0
        %1813 = vmatpush1.bf16.msra.mxu0 %v1791
        %1814 = vmatprep.subr.bf16.mxu0 0
        %1815 = vmatpush1.bf16.msra.mxu0 %v1792
        %1816 = vmatprep.subr.bf16.mxu0 0
        %1817 = vmatpush1.bf16.msra.mxu0 %v1793
        %1818 = vmatprep.subr.bf16.mxu0 0
        %1819 = vmatpush1.bf16.msra.mxu0 0
        %1820 = vmatprep.subr.bf16.mxu0 0
        %1821 = vmatpush1.bf16.msra.mxu0 0
        %1822 = vmatprep.subr.bf16.mxu0 0
        %1823 = vmatpush1.bf16.msra.mxu0 0
        %1824 = vmatprep.subr.bf16.mxu0 0
        %1825 = vmatpush1.bf16.msra.mxu0 0
        %1826 = vmatprep.subr.bf16.mxu0 0
        %1827 = vmatpush1.bf16.msra.mxu0 0
        %1828 = vmatprep.subr.bf16.mxu0 0
        %1829 = vmatpush1.bf16.msra.mxu0 0
        %1830 = vmatprep.subr.bf16.mxu0 0
        %1831 = vmatpush1.bf16.msra.mxu0 0
        %1832 = vmatprep.subr.bf16.mxu0 0
        %1833 = vmatpush1.bf16.msra.mxu0 0
        %1834 = vmatprep.mubr.bf16.mxu0 0
        %1835 = vmatmul.mubr.bf16.gmra.mrb[0].mxu0 %v1725
        %v1836 = vpop.f32.mrb[0].mxu0
        %v1837 = vadd.f32 %v1753, %v1836
        %v1838 = vpop.f32.mrb[0].mxu0
        %v1839 = vpop.f32.mrb[0].mxu0
        %v1840 = vadd.f32 %v1753, %v1839
        %v1841 = vpop.f32.mrb[0].mxu0
        %1842 = vmatprep.mubr.bf16.mxu0 0
        %1843 = vmatmul.mubr.bf16.gmra.mrb[0].mxu0 %v1726
        %v1844 = vpop.f32.mrb[0].mxu0
        %v1845 = vadd.f32 %v1753, %v1844
        %v1846 = vpop.f32.mrb[0].mxu0
        %v1847 = vpop.f32.mrb[0].mxu0
        %v1848 = vadd.f32 %v1753, %v1847
        %v1849 = vpop.f32.mrb[0].mxu0
        %1850 = vmatprep.mubr.bf16.mxu0 0
        %1851 = vmatmul.mubr.bf16.gmra.mrb[0].mxu0 %v1727
        %v1852 = vpop.f32.mrb[0].mxu0
        %v1853 = vadd.f32 %v1753, %v1852
        %v1854 = vpop.f32.mrb[0].mxu0
        %v1855 = vpop.f32.mrb[0].mxu0
        %v1856 = vadd.f32 %v1753, %v1855
        %v1857 = vpop.f32.mrb[0].mxu0
        %1858 = vmatprep.mubr.bf16.mxu0 0
        %1859 = vmatmul.mubr.bf16.gmra.mrb[0].mxu0 %v1728
        %v1860 = vpop.f32.mrb[0].mxu0
        %v1861 = vadd.f32 %v1753, %v1860
        %v1862 = vpop.f32.mrb[0].mxu0
        %v1863 = vpop.f32.mrb[0].mxu0
        %v1864 = vadd.f32 %v1753, %v1863
        %v1865 = vpop.f32.mrb[0].mxu0
        %1866 = vmatprep.mubr.bf16.mxu0 0
        %1867 = vmatmul.mubr.bf16.gmra.mrb[0].mxu0 %v1729
        %v1868 = vpop.f32.mrb[0].mxu0
        %v1869 = vadd.f32 %v1753, %v1868
        %v1870 = vpop.f32.mrb[0].mxu0
        %v1871 = vpop.f32.mrb[0].mxu0
        %v1872 = vadd.f32 %v1753, %v1871
        %v1873 = vpop.f32.mrb[0].mxu0
        %1874 = vmatprep.mubr.bf16.mxu0 0
        %1875 = vmatmul.mubr.bf16.gmra.mrb[0].mxu0 %v1730
        %v1876 = vpop.f32.mrb[0].mxu0
        %v1877 = vadd.f32 %v1753, %v1876
        %v1878 = vpop.f32.mrb[0].mxu0
        %v1879 = vpop.f32.mrb[0].mxu0
        %v1880 = vadd.f32 %v1753, %v1879
        %v1881 = vpop.f32.mrb[0].mxu0
        %1882 = vmatprep.mubr.bf16.mxu0 0
        %1883 = vmatmul.mubr.bf16.gmra.mrb[0].mxu0 %v1731
        %v1884 = vpop.f32.mrb[0].mxu0
        %v1885 = vadd.f32 %v1753, %v1884
        %v1886 = vpop.f32.mrb[0].mxu0
        %v1887 = vpop.f32.mrb[0].mxu0
        %v1888 = vadd.f32 %v1753, %v1887
        %v1889 = vpop.f32.mrb[0].mxu0
        %1890 = vmatprep.mubr.bf16.mxu0 0
        %1891 = vmatmul.mubr.bf16.gmra.mrb[0].mxu0 %v1732
        %v1892 = vpop.f32.mrb[0].mxu0
        %v1893 = vadd.f32 %v1753, %v1892
        %v1894 = vpop.f32.mrb[0].mxu0
        %v1895 = vpop.f32.mrb[0].mxu0
        %v1896 = vadd.f32 %v1753, %v1895
        %v1897 = vpop.f32.mrb[0].mxu0
        %1898 = vdwg.mxu0
        %v1899 = vpack.c.bf16 %v1840, %v1837
        %v1900 = vpack.c.bf16 %v1848, %v1845
        %v1901 = vpack.c.bf16 %v1856, %v1853
        %v1902 = vpack.c.bf16 %v1864, %v1861
        %v1903 = vpack.c.bf16 %v1872, %v1869
        %v1904 = vpack.c.bf16 %v1880, %v1877
        %v1905 = vpack.c.bf16 %v1888, %v1885
        %v1906 = vpack.c.bf16 %v1896, %v1893
        %v1907 = vmax.bf16 %v1899, 0
        %v1908 = vmax.bf16 %v1900, 0
        %v1909 = vmax.bf16 %v1901, 0
        %v1910 = vmax.bf16 %v1902, 0
        %v1911 = vmax.bf16 %v1903, 0
        %v1912 = vmax.bf16 %v1904, 0
        %v1913 = vmax.bf16 %v1905, 0
        %v1914 = vmax.bf16 %v1906, 0
        %v1915 = vld [vmem:[%s1 + $0x288] sm:$0xf]
        %v1916 = vld [vmem:[%s1 + $0x28c] sm:$0xf]
        %v1917 = vld [vmem:[%s1 + $0x290] sm:$0xf]
        %v1918 = vld [vmem:[%s1 + $0x294] sm:$0xf]
        %v1919 = vld [vmem:[%s1 + $0x298] sm:$0xf]
        %v1920 = vld [vmem:[%s1 + $0x29c] sm:$0xf]
        %v1921 = vld [vmem:[%s1 + $0x2a0] sm:$0xf]
        %v1922 = vld [vmem:[%s1 + $0x2a4] sm:$0xf]
        %v1923 = vld [vmem:[%s1 + $0x2a8] sm:$0xf]
        %v1924 = vld [vmem:[%s1 + $0x2ac] sm:$0xf]
        %v1925 = vld [vmem:[%s1 + $0x2b0] sm:$0xf]
        %v1926 = vld [vmem:[%s1 + $0x2b4] sm:$0xf]
        %v1927 = vld [vmem:[%s1 + $0x2b8] sm:$0xf]
        %v1928 = vld [vmem:[%s1 + $0x2bc] sm:$0xf]
        %v1929 = vld [vmem:[%s1 + $0x2c0] sm:$0xf]
        %v1930 = vld [vmem:[%s1 + $0x2c4] sm:$0xf]
        %v1931 = vld [vmem:[%s2 + $0x5] sm:$0x1]
        %v1932 = vlaneseq
        %v1933 = vshrl.u32 %v1932, 7
        %v1934 = vsub.s32 0, %v1933
        %v1935 = vrot.slane %v1931, %v1934
        %v1952 = vunpack.c.l.b16 %v1915
        %v1953 = vunpack.c.l.b16 %v1916
        %v1954 = vunpack.c.l.b16 %v1917
        %v1955 = vunpack.c.l.b16 %v1918
        %v1956 = vunpack.c.l.b16 %v1919
        %v1957 = vunpack.c.l.b16 %v1920
        %v1958 = vunpack.c.l.b16 %v1921
        %v1959 = vunpack.c.l.b16 %v1922
        %v1960 = vunpack.c.l.b16 %v1923
        %v1961 = vunpack.c.l.b16 %v1924
        %v1962 = vunpack.c.l.b16 %v1925
        %v1963 = vunpack.c.l.b16 %v1926
        %v1964 = vunpack.c.l.b16 %v1927
        %v1965 = vunpack.c.l.b16 %v1928
        %v1966 = vunpack.c.l.b16 %v1929
        %v1967 = vunpack.c.l.b16 %v1930
        %v1968 = vpack.c.b16 %v1953, %v1952
        %v1969 = vpack.c.b16 %v1955, %v1954
        %v1970 = vpack.c.b16 %v1957, %v1956
        %v1971 = vpack.c.b16 %v1959, %v1958
        %v1972 = vpack.c.b16 %v1961, %v1960
        %v1973 = vpack.c.b16 %v1963, %v1962
        %v1974 = vpack.c.b16 %v1965, %v1964
        %v1975 = vpack.c.b16 %v1967, %v1966
        %1984 = vmatprep.subr.bf16.mxu0 0
        %1985 = vmatpush1.bf16.msra.mxu0 %v1968
        %1986 = vmatprep.subr.bf16.mxu0 0
        %1987 = vmatpush1.bf16.msra.mxu0 %v1969
        %1988 = vmatprep.subr.bf16.mxu0 0
        %1989 = vmatpush1.bf16.msra.mxu0 %v1970
        %1990 = vmatprep.subr.bf16.mxu0 0
        %1991 = vmatpush1.bf16.msra.mxu0 %v1971
        %1992 = vmatprep.subr.bf16.mxu0 0
        %1993 = vmatpush1.bf16.msra.mxu0 %v1972
        %1994 = vmatprep.subr.bf16.mxu0 0
        %1995 = vmatpush1.bf16.msra.mxu0 %v1973
        %1996 = vmatprep.subr.bf16.mxu0 0
        %1997 = vmatpush1.bf16.msra.mxu0 %v1974
        %1998 = vmatprep.subr.bf16.mxu0 0
        %1999 = vmatpush1.bf16.msra.mxu0 %v1975
        %2000 = vmatprep.subr.bf16.mxu0 0
        %2001 = vmatpush1.bf16.msra.mxu0 0
        %2002 = vmatprep.subr.bf16.mxu0 0
        %2003 = vmatpush1.bf16.msra.mxu0 0
        %2004 = vmatprep.subr.bf16.mxu0 0
        %2005 = vmatpush1.bf16.msra.mxu0 0
        %2006 = vmatprep.subr.bf16.mxu0 0
        %2007 = vmatpush1.bf16.msra.mxu0 0
        %2008 = vmatprep.subr.bf16.mxu0 0
        %2009 = vmatpush1.bf16.msra.mxu0 0
        %2010 = vmatprep.subr.bf16.mxu0 0
        %2011 = vmatpush1.bf16.msra.mxu0 0
        %2012 = vmatprep.subr.bf16.mxu0 0
        %2013 = vmatpush1.bf16.msra.mxu0 0
        %2014 = vmatprep.subr.bf16.mxu0 0
        %2015 = vmatpush1.bf16.msra.mxu0 0
        %2016 = vmatprep.mubr.bf16.mxu0 0
        %2017 = vmatmul.mubr.bf16.gmra.mrb[0].mxu0 %v1907
        %v2018 = vpop.f32.mrb[0].mxu0
        %v2019 = vadd.f32 %v1935, %v2018
        %v2020 = vpop.f32.mrb[0].mxu0
        %v2021 = vpop.f32.mrb[0].mxu0
        %v2022 = vadd.f32 %v1935, %v2021
        %v2023 = vpop.f32.mrb[0].mxu0
        %2024 = vmatprep.mubr.bf16.mxu0 0
        %2025 = vmatmul.mubr.bf16.gmra.mrb[0].mxu0 %v1908
        %v2026 = vpop.f32.mrb[0].mxu0
        %v2027 = vadd.f32 %v1935, %v2026
        %v2028 = vpop.f32.mrb[0].mxu0
        %v2029 = vpop.f32.mrb[0].mxu0
        %v2030 = vadd.f32 %v1935, %v2029
        %v2031 = vpop.f32.mrb[0].mxu0
        %2032 = vmatprep.mubr.bf16.mxu0 0
        %2033 = vmatmul.mubr.bf16.gmra.mrb[0].mxu0 %v1909
        %v2034 = vpop.f32.mrb[0].mxu0
        %v2035 = vadd.f32 %v1935, %v2034
        %v2036 = vpop.f32.mrb[0].mxu0
        %v2037 = vpop.f32.mrb[0].mxu0
        %v2038 = vadd.f32 %v1935, %v2037
        %v2039 = vpop.f32.mrb[0].mxu0
        %2040 = vmatprep.mubr.bf16.mxu0 0
        %2041 = vmatmul.mubr.bf16.gmra.mrb[0].mxu0 %v1910
        %v2042 = vpop.f32.mrb[0].mxu0
        %v2043 = vadd.f32 %v1935, %v2042
        %v2044 = vpop.f32.mrb[0].mxu0
        %v2045 = vpop.f32.mrb[0].mxu0
        %v2046 = vadd.f32 %v1935, %v2045
        %v2047 = vpop.f32.mrb[0].mxu0
        %2048 = vmatprep.mubr.bf16.mxu0 0
        %2049 = vmatmul.mubr.bf16.gmra.mrb[0].mxu0 %v1911
        %v2050 = vpop.f32.mrb[0].mxu0
        %v2051 = vadd.f32 %v1935, %v2050
        %v2052 = vpop.f32.mrb[0].mxu0
        %v2053 = vpop.f32.mrb[0].mxu0
        %v2054 = vadd.f32 %v1935, %v2053
        %v2055 = vpop.f32.mrb[0].mxu0
        %2056 = vmatprep.mubr.bf16.mxu0 0
        %2057 = vmatmul.mubr.bf16.gmra.mrb[0].mxu0 %v1912
        %v2058 = vpop.f32.mrb[0].mxu0
        %v2059 = vadd.f32 %v1935, %v2058
        %v2060 = vpop.f32.mrb[0].mxu0
        %v2061 = vpop.f32.mrb[0].mxu0
        %v2062 = vadd.f32 %v1935, %v2061
        %v2063 = vpop.f32.mrb[0].mxu0
        %2064 = vmatprep.mubr.bf16.mxu0 0
        %2065 = vmatmul.mubr.bf16.gmra.mrb[0].mxu0 %v1913
        %v2066 = vpop.f32.mrb[0].mxu0
        %v2067 = vadd.f32 %v1935, %v2066
        %v2068 = vpop.f32.mrb[0].mxu0
        %v2069 = vpop.f32.mrb[0].mxu0
        %v2070 = vadd.f32 %v1935, %v2069
        %v2071 = vpop.f32.mrb[0].mxu0
        %2072 = vmatprep.mubr.bf16.mxu0 0
        %2073 = vmatmul.mubr.bf16.gmra.mrb[0].mxu0 %v1914
        %v2074 = vpop.f32.mrb[0].mxu0
        %v2075 = vadd.f32 %v1935, %v2074
        %v2076 = vpop.f32.mrb[0].mxu0
        %v2077 = vpop.f32.mrb[0].mxu0
        %v2078 = vadd.f32 %v1935, %v2077
        %v2079 = vpop.f32.mrb[0].mxu0
        %2080 = vdwg.mxu0
        %v2081 = vpack.c.bf16 %v2022, %v2019
        %v2082 = vpack.c.bf16 %v2030, %v2027
        %v2083 = vpack.c.bf16 %v2038, %v2035
        %v2084 = vpack.c.bf16 %v2046, %v2043
        %v2085 = vpack.c.bf16 %v2054, %v2051
        %v2086 = vpack.c.bf16 %v2062, %v2059
        %v2087 = vpack.c.bf16 %v2070, %v2067
        %v2088 = vpack.c.bf16 %v2078, %v2075
        %v2097 = vunpack.c.l.b16 %v2081
        %v2098 = vunpack.c.h.b16 %v2081
        %v2099 = vunpack.c.l.b16 %v2082
        %v2100 = vunpack.c.h.b16 %v2082
        %v2101 = vunpack.c.l.b16 %v2083
        %v2102 = vunpack.c.h.b16 %v2083
        %v2103 = vunpack.c.l.b16 %v2084
        %v2104 = vunpack.c.h.b16 %v2084
        %v2105 = vunpack.c.l.b16 %v2085
        %v2106 = vunpack.c.h.b16 %v2085
        %v2107 = vunpack.c.l.b16 %v2086
        %v2108 = vunpack.c.h.b16 %v2086
        %v2109 = vunpack.c.l.b16 %v2087
        %v2110 = vunpack.c.h.b16 %v2087
        %v2111 = vunpack.c.l.b16 %v2088
        %v2112 = vunpack.c.h.b16 %v2088
        %v2113 = vpack.c.b16 %v2097, %v2097
        %v2114 = vpack.c.b16 %v2098, %v2098
        %v2115 = vpack.c.b16 %v2099, %v2099
        %v2116 = vpack.c.b16 %v2100, %v2100
        %v2117 = vpack.c.b16 %v2101, %v2101
        %v2118 = vpack.c.b16 %v2102, %v2102
        %v2119 = vpack.c.b16 %v2103, %v2103
        %v2120 = vpack.c.b16 %v2104, %v2104
        %v2121 = vpack.c.b16 %v2105, %v2105
        %v2122 = vpack.c.b16 %v2106, %v2106
        %v2123 = vpack.c.b16 %v2107, %v2107
        %v2124 = vpack.c.b16 %v2108, %v2108
        %v2125 = vpack.c.b16 %v2109, %v2109
        %v2126 = vpack.c.b16 %v2110, %v2110
        %v2127 = vpack.c.b16 %v2111, %v2111
        %v2128 = vpack.c.b16 %v2112, %v2112
        %2145 = vst [vmem:[%s166] sm:$0xf] %v2113
        %2146 = vst [vmem:[%s166 + $0x4] sm:$0xf] %v2114
        %2147 = vst [vmem:[%s166 + $0x8] sm:$0xf] %v2115
        %2148 = vst [vmem:[%s166 + $0xc] sm:$0xf] %v2116
        %2149 = vst [vmem:[%s166 + $0x10] sm:$0xf] %v2117
        %2150 = vst [vmem:[%s166 + $0x14] sm:$0xf] %v2118
        %2151 = vst [vmem:[%s166 + $0x18] sm:$0xf] %v2119
        %2152 = vst [vmem:[%s166 + $0x1c] sm:$0xf] %v2120
        %2153 = vst [vmem:[%s166 + $0x20] sm:$0xf] %v2121
        %2154 = vst [vmem:[%s166 + $0x24] sm:$0xf] %v2122
        %2155 = vst [vmem:[%s166 + $0x28] sm:$0xf] %v2123
        %2156 = vst [vmem:[%s166 + $0x2c] sm:$0xf] %v2124
        %2157 = vst [vmem:[%s166 + $0x30] sm:$0xf] %v2125
        %2158 = vst [vmem:[%s166 + $0x34] sm:$0xf] %v2126
        %2159 = vst [vmem:[%s166 + $0x38] sm:$0xf] %v2127
        %2160 = vst [vmem:[%s166 + $0x3c] sm:$0xf] %v2128
        %s2161 = sand.u32 %s93, 1
        %s2162 = scalar_lea.sflag [#allocation3], %s2161
        %s2163 = sand.u32 %s93, 1
        %s2164 = smul.addr %s2163, 64
        %s2165 = scalar_lea.vmem [#allocation2], %s2164
        // Predicated region
        $region33: #{tpu_custom_call.1} parent=31 // pred_check
          %p2166 = pneg %p103
        $region34: #{tpu_custom_call.1} parent=31 // pred_check_branch
          %2168 = sbr.rel (%p2166) target = $region36
        $region35: #{tpu_custom_call.1} parent=31 // pred_region
          %s2169 = smul.u32 16, %s17
          %s2171 = ssub.s32 1024, 1024
          %2172 = vsyncadd %s2162, %s2171
          %s2173 = smul.addr %s2169, 64
          %s2174 = scalar_lea.hbm %s3, %s2173
          %s2175 = sshll.u32 %s2165, 4
          %s2176 = int_to_ptr.vmem [resolvable:$true] %s2175
          %2181 = dma.vmem_to_hbm [thread:$0]  %s2176, 1024, %s2174, %s2162, 64, 64, 4
        $region36: #{tpu_custom_call.1} parent=31 // pred_fallthru
          _
      $region32: #{tpu_custom_call.1} parent=5 // pred_fallthru
        _
      %p2182 = scmp.le.s32.totalorder 2, %s12
      // Predicated region
      $region37: #{tpu_custom_call.1} parent=5 // pred_check
        %p2183 = pneg %p2182
      $region38: #{tpu_custom_call.1} parent=5 // pred_check_branch
        %2185 = sbr.rel (%p2183) target = $region40
      $region39: #{tpu_custom_call.1} parent=5 // pred_region
        %s2186 = ssub.s32 %s12, 2
        // Predicated region
        $region41: #{tpu_custom_call.1} parent=39 // pred_check
          %p2187 = pneg %p109
        $region42: #{tpu_custom_call.1} parent=39 // pred_check_branch
          %2189 = sbr.rel (%p2187) target = $region44
        $region43: #{tpu_custom_call.1} parent=39 // pred_region
          %s2190 = sand.u32 %s94, 1
          %s2191 = scalar_lea.sflag [#allocation3], %s2190
          %s2192 = sand.u32 %s94, 1
          %s2193 = smul.addr %s2192, 64
          %s2194 = scalar_lea.vmem [#allocation2], %s2193
          %2195 = dma.done %s2191, 1024
        $region44: #{tpu_custom_call.1} parent=39 // pred_fallthru
          _
      $region40: #{tpu_custom_call.1} parent=5 // pred_fallthru
        _
    $region6: #{tpu_custom_call.1} parent=1 // loop_footer
      %s16 = sadd.s32 1, %s12
    $region7: #{tpu_custom_call.1} parent=1 // loop_footer_branch
      %11 = sbr.rel target = $region3
    $region8: #{tpu_custom_call.1} parent=1 // loop_exit
      _
    %2196 = vsyncpa [#allocation3], 1
    %s2197 = scalar_lea.sflag [#allocation3], 1
    %2198 = vsyncpa %s2197, 1

</llo_original>
